<compile_context>
chip_gen: v6e
topology: v6e:2x2x1
jax: 0.10.0
libtpu: 0.0.40
codegen_flags: <defaults>
</compile_context>

<pallas_src>
import functools

import jax
import jax.numpy as jnp
from jax.experimental import pallas as pl
from jax.experimental.pallas import tpu as pltpu


NEG_SLOPE = 0.01     # F.leaky_relu default
FEATURE_SIZE = 1600  # 40 * 40
H1 = 400             # lin1 out (unpadded; never stored to HBM per-call)
H2 = 100             # lin2 out (unpadded)
OUT_PAD = 128        # lin3 out padded to a lane-dense 128 (sliced back in wrapper)


def _leaky_relu(x):
    return jnp.where(x > 0, x, NEG_SLOPE * x)


def _pad2(x, rows, cols):
    return jnp.pad(x, ((0, rows - x.shape[0]), (0, cols - x.shape[1])))


def gcn_mlp_kernel(x_ref, w1_ref, b1_ref, w2_ref, b2_ref, w3_ref, b3_ref, o_ref):
    """Fused 3-layer MLP: lin1 -> leaky_relu -> lin2 -> leaky_relu -> lin3 -> tanh.

    Activation arrives f32 and is cast to bf16 in-kernel; weights are bf16;
    accumulation and elementwise epilogues are f32.
    """
    a = x_ref[...].astype(jnp.bfloat16)                                  # (tm, 1600) bf16
    h1 = jnp.dot(a, w1_ref[...], preferred_element_type=jnp.float32)    # (tm, 400) f32
    h1 = _leaky_relu(h1 + b1_ref[...])
    h2 = jnp.dot(h1.astype(jnp.bfloat16), w2_ref[...],
                 preferred_element_type=jnp.float32)                    # (tm, 100) f32
    h2 = _leaky_relu(h2 + b2_ref[...])
    h3 = jnp.dot(h2.astype(jnp.bfloat16), w3_ref[...],
                 preferred_element_type=jnp.float32)                    # (tm, 128) f32
    o_ref[...] = jnp.tanh(h3 + b3_ref[...]).astype(o_ref.dtype)


def prepare_params(params):
    """One-time (outside jit) cast/pad of the Linear parameters.

    Weights -> bf16, biases -> f32. Only lin3's output dim is padded (to 128)
    so the kernel's HBM output is lane-dense; hidden widths stay 400/100
    because their BlockSpecs are full-array and the intermediates never hit HBM.
    """
    return {
        "w1": params["w1"].astype(jnp.bfloat16),                       # (1600, 400)
        "b1": params["b1"].astype(jnp.float32),                        # (1, 400)
        "w2": params["w2"].astype(jnp.bfloat16),                       # (400, 100)
        "b2": params["b2"].astype(jnp.float32),                        # (1, 100)
        "w3": _pad2(params["w3"], H2, OUT_PAD).astype(jnp.bfloat16),   # (100, 128)
        "b3": _pad2(params["b3"], 1, OUT_PAD).astype(jnp.float32),     # (1, 128)
    }


def _choose_tm(b_sub):
    """Pick the batch tile. Small batches: one zero-waste tile (weight-DMA
    bound anyway). Larger batches: {256,128,64} minimizing zero-pad waste,
    tie-broken toward an even grid (v7x has 2 TensorCores) then larger tm."""
    if b_sub < 256:
        return b_sub
    best_key, best_tm = None, None
    for tm in (256, 128, 64):
        gm = -(-b_sub // tm)
        pad = gm * tm - b_sub
        key = (pad, gm % 2, -tm)
        if best_key is None or key < best_key:
            best_key, best_tm = key, tm
    return best_tm


@functools.partial(jax.jit, static_argnames=("n_hidden",))
def gcn_forward(image, prepared, n_hidden):
    """image: (num_graphs, 40, 40) f32; prepared: output of prepare_params.
    Returns (num_graphs, n_hidden) f32."""
    num_graphs = image.shape[0]
    feature_size = image.shape[1] * image.shape[2]
    assert feature_size == FEATURE_SIZE

    # emb.squeeze(1).flatten(1,2) == reshape; stays f32 (cast happens in-kernel).
    a = image.reshape(num_graphs, feature_size)

    # Batch tiling: sublane-align rows, pick tile, pad rows (no-op when aligned).
    b_sub = ((num_graphs + 7) // 8) * 8
    tm = _choose_tm(b_sub)
    b_pad = ((b_sub + tm - 1) // tm) * tm
    a = jnp.pad(a, ((0, b_pad - num_graphs), (0, 0)))
    grid_m = b_pad // tm

    w1, b1 = prepared["w1"], prepared["b1"]
    w2, b2 = prepared["w2"], prepared["b2"]
    w3, b3 = prepared["w3"], prepared["b3"]

    # Weights/biases stay VMEM-resident: constant block index across the grid.
    resident = lambda shape: pl.BlockSpec(shape, lambda i: (0,) * len(shape))

    flops = 2 * b_pad * (FEATURE_SIZE * H1 + H1 * H2 + H2 * OUT_PAD)
    bytes_accessed = (a.size * 4                                   # f32 activation in
                      + (w1.size + w2.size + w3.size) * 2          # bf16 weights
                      + (b1.size + b2.size + b3.size) * 4          # f32 biases
                      + b_pad * OUT_PAD * 4)                       # f32 output

    out = pl.pallas_call(
        gcn_mlp_kernel,
        out_shape=jax.ShapeDtypeStruct((b_pad, OUT_PAD), jnp.float32),
        grid=(grid_m,),
        in_specs=[
            pl.BlockSpec((tm, FEATURE_SIZE), lambda i: (i, 0)),    # activation tiles over batch
            resident(w1.shape), resident(b1.shape),
            resident(w2.shape), resident(b2.shape),
            resident(w3.shape), resident(b3.shape),
        ],
        out_specs=pl.BlockSpec((tm, OUT_PAD), lambda i: (i, 0)),
        compiler_params=pltpu.CompilerParams(
            dimension_semantics=("parallel",),
        ),
        cost_estimate=pl.CostEstimate(
            flops=flops,
            transcendentals=b_pad * OUT_PAD,
            bytes_accessed=bytes_accessed,
        ),
    )(a, w1, b1, w2, b2, w3, b3)

    # Trim batch padding and padded output lanes back to the true n_hidden.
    return out[:num_graphs, :n_hidden]


def init_params(key, n_hidden):
    """Deterministic init mirroring nn.Linear shapes: lin1(1600->400),
    lin2(400->100), lin3(100->n_hidden). Weights stored as (in, out), f32."""
    def linear(key, fan_in, fan_out):
        kw, kb = jax.random.split(key)
        bound = 1.0 / jnp.sqrt(fan_in)
        w = jax.random.uniform(kw, (fan_in, fan_out), jnp.float32, -bound, bound)
        b = jax.random.uniform(kb, (1, fan_out), jnp.float32, -bound, bound)
        return w, b

    k1, k2, k3 = jax.random.split(key, 3)
    w1, b1 = linear(k1, 1600, 400)
    w2, b2 = linear(k2, 400, 100)
    w3, b3 = linear(k3, 100, n_hidden)
    return {"w1": w1, "b1": b1, "w2": w2, "b2": b2, "w3": w3, "b3": b3}


if __name__ == "__main__":
    num_graphs = 8      # batch of games
    n_hidden = 32
    key = jax.random.PRNGKey(0)
    k_img, k_par = jax.random.split(key)

    image = jax.random.normal(k_img, (num_graphs, 40, 40), jnp.float32)
    params = init_params(k_par, n_hidden)
    prepared = prepare_params(params)   # one-time pad/cast, outside the jitted call

    out = gcn_forward(image, prepared, n_hidden)
    out = jax.block_until_ready(out)

    # sanity check against plain-JAX f32 reference (bf16 weights -> looser tol)
    a = image.reshape(num_graphs, 1600)
    ref = _leaky_relu(a @ params["w1"] + params["b1"])
    ref = _leaky_relu(ref @ params["w2"] + params["b2"])
    ref = jnp.tanh(ref @ params["w3"] + params["b3"])
    assert out.shape == (num_graphs, n_hidden)
    assert jnp.allclose(out, ref, atol=5e-2), "mismatch vs reference"

    print("KERNEL_OK")
</pallas_src>

<mosaic_0001>
module attributes {stable_mosaic.version = 11 : i64} {
  func.func @gcn_mlp_kernel(%arg0: i32, %arg1: memref<8x1600xf32, #tpu.memory_space<vmem>>, %arg2: memref<1600x400xbf16, #tpu.memory_space<vmem>>, %arg3: memref<1x400xf32, #tpu.memory_space<vmem>>, %arg4: memref<400x100xbf16, #tpu.memory_space<vmem>>, %arg5: memref<1x100xf32, #tpu.memory_space<vmem>>, %arg6: memref<100x128xbf16, #tpu.memory_space<vmem>>, %arg7: memref<1x128xf32, #tpu.memory_space<vmem>>, %arg8: memref<8x128xf32, #tpu.memory_space<vmem>>) attributes {dimension_semantics = [#tpu.dimension_semantics<parallel>], iteration_bounds = array<i64: 1>, scalar_prefetch = 0 : i64, scratch_operands = 0 : i64, tpu.core_type = #tpu.core_type<tc>, window_params = [{transform_indices = @transform_0, window_bounds = array<i64: 8, 1600>}, {pipeline_mode = #tpu.pipeline_mode<synchronous>, transform_indices = @transform_1, window_bounds = array<i64: 1600, 400>}, {pipeline_mode = #tpu.pipeline_mode<synchronous>, transform_indices = @transform_2, window_bounds = array<i64: 1, 400>}, {pipeline_mode = #tpu.pipeline_mode<synchronous>, transform_indices = @transform_3, window_bounds = array<i64: 400, 100>}, {pipeline_mode = #tpu.pipeline_mode<synchronous>, transform_indices = @transform_4, window_bounds = array<i64: 1, 100>}, {pipeline_mode = #tpu.pipeline_mode<synchronous>, transform_indices = @transform_5, window_bounds = array<i64: 100, 128>}, {pipeline_mode = #tpu.pipeline_mode<synchronous>, transform_indices = @transform_6, window_bounds = array<i64: 1, 128>}, {transform_indices = @transform_7, window_bounds = array<i64: 8, 128>}]} {
    %c0 = arith.constant 0 : index
    %c0_0 = arith.constant 0 : index
    %0 = vector.load %arg1[%c0, %c0_0] : memref<8x1600xf32, #tpu.memory_space<vmem>>, vector<8x1600xf32>
    %1 = arith.truncf %0 : vector<8x1600xf32> to vector<8x1600xbf16>
    %c0_1 = arith.constant 0 : index
    %c0_2 = arith.constant 0 : index
    %2 = vector.load %arg2[%c0_1, %c0_2] : memref<1600x400xbf16, #tpu.memory_space<vmem>>, vector<1600x400xbf16>
    %cst = arith.constant dense<0.000000e+00> : vector<8x400xf32>
    %3 = tpu.matmul %1, %2, %cst {dimension_numbers = #tpu.dot_dimension_numbers<[1], [0], [0], [1], [0, 0, 1, 1], [], []>} : vector<8x1600xbf16>, vector<1600x400xbf16>, vector<8x400xf32> -> vector<8x400xf32>
    %c0_3 = arith.constant 0 : index
    %c0_4 = arith.constant 0 : index
    %4 = vector.load %arg3[%c0_3, %c0_4] : memref<1x400xf32, #tpu.memory_space<vmem>>, vector<1x400xf32>
    %5 = vector.broadcast %4 : vector<1x400xf32> to vector<8x400xf32>
    %6 = arith.addf %3, %5 : vector<8x400xf32>
    %cst_5 = arith.constant 0.000000e+00 : f32
    %7 = vector.broadcast %cst_5 : f32 to vector<8x400xf32>
    %8 = arith.cmpf ogt, %6, %7 : vector<8x400xf32>
    %cst_6 = arith.constant 0.00999999977 : f32
    %9 = vector.broadcast %cst_6 : f32 to vector<8x400xf32>
    %10 = arith.mulf %9, %6 : vector<8x400xf32>
    %11 = arith.select %8, %6, %10 : vector<8x400xi1>, vector<8x400xf32>
    %12 = arith.truncf %11 : vector<8x400xf32> to vector<8x400xbf16>
    %c0_7 = arith.constant 0 : index
    %c0_8 = arith.constant 0 : index
    %13 = vector.load %arg4[%c0_7, %c0_8] : memref<400x100xbf16, #tpu.memory_space<vmem>>, vector<400x100xbf16>
    %cst_9 = arith.constant dense<0.000000e+00> : vector<8x100xf32>
    %14 = tpu.matmul %12, %13, %cst_9 {dimension_numbers = #tpu.dot_dimension_numbers<[1], [0], [0], [1], [0, 0, 1, 1], [], []>} : vector<8x400xbf16>, vector<400x100xbf16>, vector<8x100xf32> -> vector<8x100xf32>
    %c0_10 = arith.constant 0 : index
    %c0_11 = arith.constant 0 : index
    %15 = vector.load %arg5[%c0_10, %c0_11] : memref<1x100xf32, #tpu.memory_space<vmem>>, vector<1x100xf32>
    %16 = vector.broadcast %15 : vector<1x100xf32> to vector<8x100xf32>
    %17 = arith.addf %14, %16 : vector<8x100xf32>
    %cst_12 = arith.constant 0.000000e+00 : f32
    %18 = vector.broadcast %cst_12 : f32 to vector<8x100xf32>
    %19 = arith.cmpf ogt, %17, %18 : vector<8x100xf32>
    %cst_13 = arith.constant 0.00999999977 : f32
    %20 = vector.broadcast %cst_13 : f32 to vector<8x100xf32>
    %21 = arith.mulf %20, %17 : vector<8x100xf32>
    %22 = arith.select %19, %17, %21 : vector<8x100xi1>, vector<8x100xf32>
    %23 = arith.truncf %22 : vector<8x100xf32> to vector<8x100xbf16>
    %c0_14 = arith.constant 0 : index
    %c0_15 = arith.constant 0 : index
    %24 = vector.load %arg6[%c0_14, %c0_15] : memref<100x128xbf16, #tpu.memory_space<vmem>>, vector<100x128xbf16>
    %cst_16 = arith.constant dense<0.000000e+00> : vector<8x128xf32>
    %25 = tpu.matmul %23, %24, %cst_16 {dimension_numbers = #tpu.dot_dimension_numbers<[1], [0], [0], [1], [0, 0, 1, 1], [], []>} : vector<8x100xbf16>, vector<100x128xbf16>, vector<8x128xf32> -> vector<8x128xf32>
    %c0_17 = arith.constant 0 : index
    %c0_18 = arith.constant 0 : index
    %26 = vector.load %arg7[%c0_17, %c0_18] : memref<1x128xf32, #tpu.memory_space<vmem>>, vector<1x128xf32>
    %27 = vector.broadcast %26 : vector<1x128xf32> to vector<8x128xf32>
    %28 = arith.addf %25, %27 : vector<8x128xf32>
    %29 = math.tanh %28 : vector<8x128xf32>
    %c0_19 = arith.constant 0 : index
    %c0_20 = arith.constant 0 : index
    %30 = vector.load %arg8[%c0_19, %c0_20] : memref<8x128xf32, #tpu.memory_space<vmem>>, vector<8x128xf32>
    tpu.vector_store %arg8[%c0_19, %c0_20], %29 {strides = array<i32>} : memref<8x128xf32, #tpu.memory_space<vmem>>, vector<8x128xf32>,
    return
  }
  func.func @transform_0(%arg0: i32) -> (i32, i32) {
    %c0_i32 = arith.constant 0 : i32
    %c0_i32_0 = arith.constant 0 : i32
    return %arg0, %c0_i32 : i32, i32
  }
  func.func @transform_1(%arg0: i32) -> (i32, i32) {
    %c0_i32 = arith.constant 0 : i32
    %c0_i32_0 = arith.constant 0 : i32
    %c0_i32_1 = arith.constant 0 : i32
    return %c0_i32, %c0_i32_0 : i32, i32
  }
  func.func @transform_2(%arg0: i32) -> (i32, i32) {
    %c0_i32 = arith.constant 0 : i32
    %c0_i32_0 = arith.constant 0 : i32
    %c0_i32_1 = arith.constant 0 : i32
    return %c0_i32, %c0_i32_0 : i32, i32
  }
  func.func @transform_3(%arg0: i32) -> (i32, i32) {
    %c0_i32 = arith.constant 0 : i32
    %c0_i32_0 = arith.constant 0 : i32
    %c0_i32_1 = arith.constant 0 : i32
    return %c0_i32, %c0_i32_0 : i32, i32
  }
  func.func @transform_4(%arg0: i32) -> (i32, i32) {
    %c0_i32 = arith.constant 0 : i32
    %c0_i32_0 = arith.constant 0 : i32
    %c0_i32_1 = arith.constant 0 : i32
    return %c0_i32, %c0_i32_0 : i32, i32
  }
  func.func @transform_5(%arg0: i32) -> (i32, i32) {
    %c0_i32 = arith.constant 0 : i32
    %c0_i32_0 = arith.constant 0 : i32
    %c0_i32_1 = arith.constant 0 : i32
    return %c0_i32, %c0_i32_0 : i32, i32
  }
  func.func @transform_6(%arg0: i32) -> (i32, i32) {
    %c0_i32 = arith.constant 0 : i32
    %c0_i32_0 = arith.constant 0 : i32
    %c0_i32_1 = arith.constant 0 : i32
    return %c0_i32, %c0_i32_0 : i32, i32
  }
  func.func @transform_7(%arg0: i32) -> (i32, i32) {
    %c0_i32 = arith.constant 0 : i32
    %c0_i32_0 = arith.constant 0 : i32
    return %arg0, %c0_i32 : i32, i32
  }
}

</mosaic_0001>

<llo_original>
// kernel: gcn_forward.1
$region0: #{gcn_forward.1}
  #allocation0 [shape = 'u32[]', space=smem, size = 0x4, offset = 0x4, fixed_abs, tag = 'smem constant byte address 0x4 - core index']
  #allocation1 [shape = 'u32[144,128]{1,0:T(1,128)}', space=vmem, size = 0x12000, scoped, tag = 'internal scratch']
  %s0 = inlined_call_operand.vmem [shape: f32[8,1600], index: 0, kind: input, shape index: {}]
  %s1 = inlined_call_operand.vmem [shape: bf16[1600,400], index: 1, kind: input, shape index: {}]
  %s2 = inlined_call_operand.vmem [shape: f32[1,400], index: 2, kind: input, shape index: {}]
  %s3 = inlined_call_operand.vmem [shape: bf16[400,100], index: 3, kind: input, shape index: {}]
  %s4 = inlined_call_operand.vmem [shape: f32[1,100], index: 4, kind: input, shape index: {}]
  %s5 = inlined_call_operand.vmem [shape: bf16[100,128], index: 5, kind: input, shape index: {}]
  %s6 = inlined_call_operand.vmem [shape: f32[1,128], index: 6, kind: input, shape index: {}]
  %s7 = inlined_call_operand.hbm [shape: f32[8,128], index: 7, kind: output, shape index: {}]
  %s8 = sld [smem:[#allocation0]]
  $region38: #{gcn_forward.1} parent=0
    _
  %s10 = ssub.s32 1, %s8
  %s11 = scalar_select 0, %s10, %s8
  $region1: #{gcn_forward.1} parent=0
    #allocation2 [shape = 'u8[4096]{0}', space=vmem, size = 0x1000, scoped, tag = 'output window, operand 0, single buffered']
    #allocation3 [shape = 's32[1]{0}', space=sflag, size = 0x4, scoped, tag = 'scoped memory for gcn_forward.1']
    %12 = vsyncpa [#allocation3], 0
    // Predicated region
    $region2: #{gcn_forward.1} parent=1 // pred_check
      _
    $region3: #{gcn_forward.1} parent=1 // pred_check_branch
      %14 = sbr.rel (0) target = $region5
    $region4: #{gcn_forward.1} parent=1 // pred_region
      _
    $region5: #{gcn_forward.1} parent=1 // pred_fallthru
      _
    // Predicated region
    $region6: #{gcn_forward.1} parent=1 // pred_check
      _
    $region7: #{gcn_forward.1} parent=1 // pred_check_branch
      %16 = sbr.rel (0) target = $region9
    $region8: #{gcn_forward.1} parent=1 // pred_region
      _
    $region9: #{gcn_forward.1} parent=1 // pred_fallthru
      _
    // Predicated region
    $region10: #{gcn_forward.1} parent=1 // pred_check
      _
    $region11: #{gcn_forward.1} parent=1 // pred_check_branch
      %18 = sbr.rel (0) target = $region13
    $region12: #{gcn_forward.1} parent=1 // pred_region
      _
    $region13: #{gcn_forward.1} parent=1 // pred_fallthru
      _
    // Predicated region
    $region14: #{gcn_forward.1} parent=1 // pred_check
      _
    $region15: #{gcn_forward.1} parent=1 // pred_check_branch
      %20 = sbr.rel (0) target = $region17
    $region16: #{gcn_forward.1} parent=1 // pred_region
      _
    $region17: #{gcn_forward.1} parent=1 // pred_fallthru
      _
    // Predicated region
    $region18: #{gcn_forward.1} parent=1 // pred_check
      _
    $region19: #{gcn_forward.1} parent=1 // pred_check_branch
      %22 = sbr.rel (0) target = $region21
    $region20: #{gcn_forward.1} parent=1 // pred_region
      _
    $region21: #{gcn_forward.1} parent=1 // pred_fallthru
      _
    // Predicated region
    $region22: #{gcn_forward.1} parent=1 // pred_check
      _
    $region23: #{gcn_forward.1} parent=1 // pred_check_branch
      %24 = sbr.rel (0) target = $region25
    $region24: #{gcn_forward.1} parent=1 // pred_region
      _
    $region25: #{gcn_forward.1} parent=1 // pred_fallthru
      _
    // Predicated region
    $region26: #{gcn_forward.1} parent=1 // pred_check
      _
    $region27: #{gcn_forward.1} parent=1 // pred_check_branch
      %26 = sbr.rel (0) target = $region29
    $region28: #{gcn_forward.1} parent=1 // pred_region
      _
    $region29: #{gcn_forward.1} parent=1 // pred_fallthru
      _
    %v28 = vld [vmem:[%s0] sm:$0xff]
    %v29 = vld [vmem:[%s0 + $0x8] sm:$0xff]
    %v30 = vld [vmem:[%s0 + $0x10] sm:$0xff]
    %v31 = vld [vmem:[%s0 + $0x18] sm:$0xff]
    %v32 = vld [vmem:[%s0 + $0x20] sm:$0xff]
    %v33 = vld [vmem:[%s0 + $0x28] sm:$0xff]
    %v34 = vld [vmem:[%s0 + $0x30] sm:$0xff]
    %v35 = vld [vmem:[%s0 + $0x38] sm:$0xff]
    %v36 = vld [vmem:[%s0 + $0x40] sm:$0xff]
    %v37 = vld [vmem:[%s0 + $0x48] sm:$0xff]
    %v38 = vld [vmem:[%s0 + $0x50] sm:$0xff]
    %v39 = vld [vmem:[%s0 + $0x58] sm:$0xff]
    %v40 = vld [vmem:[%s0 + $0x60] sm:$0xff]
    %v41 = vpack.c.bf16 %v28, %v28
    %v42 = vpack.c.bf16 %v29, %v29
    %v43 = vpack.c.bf16 %v30, %v30
    %v44 = vpack.c.bf16 %v31, %v31
    %v45 = vpack.c.bf16 %v32, %v32
    %v46 = vpack.c.bf16 %v33, %v33
    %v47 = vpack.c.bf16 %v34, %v34
    %v48 = vpack.c.bf16 %v35, %v35
    %v49 = vpack.c.bf16 %v36, %v36
    %v50 = vpack.c.bf16 %v37, %v37
    %v51 = vpack.c.bf16 %v38, %v38
    %v52 = vpack.c.bf16 %v39, %v39
    %v53 = vpack.c.bf16 %v40, %v40
    %v54 = vld [vmem:[%s1] sm:$0xff]
    %v55 = vld [vmem:[%s1 + $0x8] sm:$0xff]
    %v56 = vld [vmem:[%s1 + $0x10] sm:$0xff]
    %v57 = vld [vmem:[%s1 + $0x18] sm:$0xff]
    %v58 = vld [vmem:[%s1 + $0x20] sm:$0xff]
    %v59 = vld [vmem:[%s1 + $0x28] sm:$0xff]
    %v60 = vld [vmem:[%s1 + $0x30] sm:$0xff]
    %v61 = vld [vmem:[%s1 + $0x38] sm:$0xff]
    %v62 = vld [vmem:[%s1 + $0x40] sm:$0xff]
    %v63 = vld [vmem:[%s1 + $0x48] sm:$0xff]
    %v64 = vld [vmem:[%s1 + $0x50] sm:$0xff]
    %v65 = vld [vmem:[%s1 + $0x58] sm:$0xff]
    %v66 = vld [vmem:[%s1 + $0x60] sm:$0xff]
    %v67 = vld [vmem:[%s1 + $0x68] sm:$0xff]
    %v68 = vld [vmem:[%s1 + $0x70] sm:$0xff]
    %v69 = vld [vmem:[%s1 + $0x78] sm:$0xff]
    %v70 = vld [vmem:[%s1 + $0x80] sm:$0xff]
    %v71 = vld [vmem:[%s1 + $0x88] sm:$0xff]
    %v72 = vld [vmem:[%s1 + $0x90] sm:$0xff]
    %v73 = vld [vmem:[%s1 + $0x98] sm:$0xff]
    %v74 = vld [vmem:[%s1 + $0xa0] sm:$0xff]
    %v75 = vld [vmem:[%s1 + $0xa8] sm:$0xff]
    %v76 = vld [vmem:[%s1 + $0xb0] sm:$0xff]
    %v77 = vld [vmem:[%s1 + $0xb8] sm:$0xff]
    %v78 = vld [vmem:[%s1 + $0xc0] sm:$0xff]
    %v79 = vld [vmem:[%s1 + $0xc8] sm:$0xff]
    %v80 = vld [vmem:[%s1 + $0xd0] sm:$0xff]
    %v81 = vld [vmem:[%s1 + $0xd8] sm:$0xff]
    %v82 = vld [vmem:[%s1 + $0xe0] sm:$0xff]
    %v83 = vld [vmem:[%s1 + $0xe8] sm:$0xff]
    %v84 = vld [vmem:[%s1 + $0xf0] sm:$0xff]
    %v85 = vld [vmem:[%s1 + $0xf8] sm:$0xff]
    %v86 = vld [vmem:[%s1 + $0x100] sm:$0xff]
    %v87 = vld [vmem:[%s1 + $0x108] sm:$0xff]
    %v88 = vld [vmem:[%s1 + $0x110] sm:$0xff]
    %v89 = vld [vmem:[%s1 + $0x118] sm:$0xff]
    %v90 = vld [vmem:[%s1 + $0x120] sm:$0xff]
    %v91 = vld [vmem:[%s1 + $0x128] sm:$0xff]
    %v92 = vld [vmem:[%s1 + $0x130] sm:$0xff]
    %v93 = vld [vmem:[%s1 + $0x138] sm:$0xff]
    %v94 = vld [vmem:[%s1 + $0x140] sm:$0xff]
    %v95 = vld [vmem:[%s1 + $0x148] sm:$0xff]
    %v96 = vld [vmem:[%s1 + $0x150] sm:$0xff]
    %v97 = vld [vmem:[%s1 + $0x158] sm:$0xff]
    %v98 = vld [vmem:[%s1 + $0x160] sm:$0xff]
    %v99 = vld [vmem:[%s1 + $0x168] sm:$0xff]
    %v100 = vld [vmem:[%s1 + $0x170] sm:$0xff]
    %v101 = vld [vmem:[%s1 + $0x178] sm:$0xff]
    %v102 = vld [vmem:[%s1 + $0x180] sm:$0xff]
    %v103 = vld [vmem:[%s1 + $0x188] sm:$0xff]
    %v104 = vld [vmem:[%s1 + $0x190] sm:$0xff]
    %v105 = vld [vmem:[%s1 + $0x198] sm:$0xff]
    %v106 = vld [vmem:[%s1 + $0x1a0] sm:$0xff]
    %v107 = vld [vmem:[%s1 + $0x1a8] sm:$0xff]
    %v108 = vld [vmem:[%s1 + $0x1b0] sm:$0xff]
    %v109 = vld [vmem:[%s1 + $0x1b8] sm:$0xff]
    %v110 = vld [vmem:[%s1 + $0x1c0] sm:$0xff]
    %v111 = vld [vmem:[%s1 + $0x1c8] sm:$0xff]
    %v112 = vld [vmem:[%s1 + $0x1d0] sm:$0xff]
    %v113 = vld [vmem:[%s1 + $0x1d8] sm:$0xff]
    %v114 = vld [vmem:[%s1 + $0x1e0] sm:$0xff]
    %v115 = vld [vmem:[%s1 + $0x1e8] sm:$0xff]
    %v116 = vld [vmem:[%s1 + $0x1f0] sm:$0xff]
    %v117 = vld [vmem:[%s1 + $0x1f8] sm:$0xff]
    %v118 = vld [vmem:[%s1 + $0x200] sm:$0xff]
    %v119 = vld [vmem:[%s1 + $0x208] sm:$0xff]
    %v120 = vld [vmem:[%s1 + $0x210] sm:$0xff]
    %v121 = vld [vmem:[%s1 + $0x218] sm:$0xff]
    %v122 = vld [vmem:[%s1 + $0x220] sm:$0xff]
    %v123 = vld [vmem:[%s1 + $0x228] sm:$0xff]
    %v124 = vld [vmem:[%s1 + $0x230] sm:$0xff]
    %v125 = vld [vmem:[%s1 + $0x238] sm:$0xff]
    %v126 = vld [vmem:[%s1 + $0x240] sm:$0xff]
    %v127 = vld [vmem:[%s1 + $0x248] sm:$0xff]
    %v128 = vld [vmem:[%s1 + $0x250] sm:$0xff]
    %v129 = vld [vmem:[%s1 + $0x258] sm:$0xff]
    %v130 = vld [vmem:[%s1 + $0x260] sm:$0xff]
    %v131 = vld [vmem:[%s1 + $0x268] sm:$0xff]
    %v132 = vld [vmem:[%s1 + $0x270] sm:$0xff]
    %v133 = vld [vmem:[%s1 + $0x278] sm:$0xff]
    %v134 = vld [vmem:[%s1 + $0x280] sm:$0xff]
    %v135 = vld [vmem:[%s1 + $0x288] sm:$0xff]
    %v136 = vld [vmem:[%s1 + $0x290] sm:$0xff]
    %v137 = vld [vmem:[%s1 + $0x298] sm:$0xff]
    %v138 = vld [vmem:[%s1 + $0x2a0] sm:$0xff]
    %v139 = vld [vmem:[%s1 + $0x2a8] sm:$0xff]
    %v140 = vld [vmem:[%s1 + $0x2b0] sm:$0xff]
    %v141 = vld [vmem:[%s1 + $0x2b8] sm:$0xff]
    %v142 = vld [vmem:[%s1 + $0x2c0] sm:$0xff]
    %v143 = vld [vmem:[%s1 + $0x2c8] sm:$0xff]
    %v144 = vld [vmem:[%s1 + $0x2d0] sm:$0xff]
    %v145 = vld [vmem:[%s1 + $0x2d8] sm:$0xff]
    %v146 = vld [vmem:[%s1 + $0x2e0] sm:$0xff]
    %v147 = vld [vmem:[%s1 + $0x2e8] sm:$0xff]
    %v148 = vld [vmem:[%s1 + $0x2f0] sm:$0xff]
    %v149 = vld [vmem:[%s1 + $0x2f8] sm:$0xff]
    %v150 = vld [vmem:[%s1 + $0x300] sm:$0xff]
    %v151 = vld [vmem:[%s1 + $0x308] sm:$0xff]
    %v152 = vld [vmem:[%s1 + $0x310] sm:$0xff]
    %v153 = vld [vmem:[%s1 + $0x318] sm:$0xff]
    %v154 = vld [vmem:[%s1 + $0x320] sm:$0xff]
    %v155 = vld [vmem:[%s1 + $0x328] sm:$0xff]
    %v156 = vld [vmem:[%s1 + $0x330] sm:$0xff]
    %v157 = vld [vmem:[%s1 + $0x338] sm:$0xff]
    %v158 = vld [vmem:[%s1 + $0x340] sm:$0xff]
    %v159 = vld [vmem:[%s1 + $0x348] sm:$0xff]
    %v160 = vld [vmem:[%s1 + $0x350] sm:$0xff]
    %v161 = vld [vmem:[%s1 + $0x358] sm:$0xff]
    %v162 = vld [vmem:[%s1 + $0x360] sm:$0xff]
    %v163 = vld [vmem:[%s1 + $0x368] sm:$0xff]
    %v164 = vld [vmem:[%s1 + $0x370] sm:$0xff]
    %v165 = vld [vmem:[%s1 + $0x378] sm:$0xff]
    %v166 = vld [vmem:[%s1 + $0x380] sm:$0xff]
    %v167 = vld [vmem:[%s1 + $0x388] sm:$0xff]
    %v168 = vld [vmem:[%s1 + $0x390] sm:$0xff]
    %v169 = vld [vmem:[%s1 + $0x398] sm:$0xff]
    %v170 = vld [vmem:[%s1 + $0x3a0] sm:$0xff]
    %v171 = vld [vmem:[%s1 + $0x3a8] sm:$0xff]
    %v172 = vld [vmem:[%s1 + $0x3b0] sm:$0xff]
    %v173 = vld [vmem:[%s1 + $0x3b8] sm:$0xff]
    %v174 = vld [vmem:[%s1 + $0x3c0] sm:$0xff]
    %v175 = vld [vmem:[%s1 + $0x3c8] sm:$0xff]
    %v176 = vld [vmem:[%s1 + $0x3d0] sm:$0xff]
    %v177 = vld [vmem:[%s1 + $0x3d8] sm:$0xff]
    %v178 = vld [vmem:[%s1 + $0x3e0] sm:$0xff]
    %v179 = vld [vmem:[%s1 + $0x3e8] sm:$0xff]
    %v180 = vld [vmem:[%s1 + $0x3f0] sm:$0xff]
    %v181 = vld [vmem:[%s1 + $0x3f8] sm:$0xff]
    %v182 = vld [vmem:[%s1 + $0x400] sm:$0xff]
    %v183 = vld [vmem:[%s1 + $0x408] sm:$0xff]
    %v184 = vld [vmem:[%s1 + $0x410] sm:$0xff]
    %v185 = vld [vmem:[%s1 + $0x418] sm:$0xff]
    %v186 = vld [vmem:[%s1 + $0x420] sm:$0xff]
    %v187 = vld [vmem:[%s1 + $0x428] sm:$0xff]
    %v188 = vld [vmem:[%s1 + $0x430] sm:$0xff]
    %v189 = vld [vmem:[%s1 + $0x438] sm:$0xff]
    %v190 = vld [vmem:[%s1 + $0x440] sm:$0xff]
    %v191 = vld [vmem:[%s1 + $0x448] sm:$0xff]
    %v192 = vld [vmem:[%s1 + $0x450] sm:$0xff]
    %v193 = vld [vmem:[%s1 + $0x458] sm:$0xff]
    %v194 = vld [vmem:[%s1 + $0x460] sm:$0xff]
    %v195 = vld [vmem:[%s1 + $0x468] sm:$0xff]
    %v196 = vld [vmem:[%s1 + $0x470] sm:$0xff]
    %v197 = vld [vmem:[%s1 + $0x478] sm:$0xff]
    %v198 = vld [vmem:[%s1 + $0x480] sm:$0xff]
    %v199 = vld [vmem:[%s1 + $0x488] sm:$0xff]
    %v200 = vld [vmem:[%s1 + $0x490] sm:$0xff]
    %v201 = vld [vmem:[%s1 + $0x498] sm:$0xff]
    %v202 = vld [vmem:[%s1 + $0x4a0] sm:$0xff]
    %v203 = vld [vmem:[%s1 + $0x4a8] sm:$0xff]
    %v204 = vld [vmem:[%s1 + $0x4b0] sm:$0xff]
    %v205 = vld [vmem:[%s1 + $0x4b8] sm:$0xff]
    %v206 = vld [vmem:[%s1 + $0x4c0] sm:$0xff]
    %v207 = vld [vmem:[%s1 + $0x4c8] sm:$0xff]
    %v208 = vld [vmem:[%s1 + $0x4d0] sm:$0xff]
    %v209 = vld [vmem:[%s1 + $0x4d8] sm:$0xff]
    %v210 = vld [vmem:[%s1 + $0x4e0] sm:$0xff]
    %v211 = vld [vmem:[%s1 + $0x4e8] sm:$0xff]
    %v212 = vld [vmem:[%s1 + $0x4f0] sm:$0xff]
    %v213 = vld [vmem:[%s1 + $0x4f8] sm:$0xff]
    %v214 = vld [vmem:[%s1 + $0x500] sm:$0xff]
    %v215 = vld [vmem:[%s1 + $0x508] sm:$0xff]
    %v216 = vld [vmem:[%s1 + $0x510] sm:$0xff]
    %v217 = vld [vmem:[%s1 + $0x518] sm:$0xff]
    %v218 = vld [vmem:[%s1 + $0x520] sm:$0xff]
    %v219 = vld [vmem:[%s1 + $0x528] sm:$0xff]
    %v220 = vld [vmem:[%s1 + $0x530] sm:$0xff]
    %v221 = vld [vmem:[%s1 + $0x538] sm:$0xff]
    %v222 = vld [vmem:[%s1 + $0x540] sm:$0xff]
    %v223 = vld [vmem:[%s1 + $0x548] sm:$0xff]
    %v224 = vld [vmem:[%s1 + $0x550] sm:$0xff]
    %v225 = vld [vmem:[%s1 + $0x558] sm:$0xff]
    %v226 = vld [vmem:[%s1 + $0x560] sm:$0xff]
    %v227 = vld [vmem:[%s1 + $0x568] sm:$0xff]
    %v228 = vld [vmem:[%s1 + $0x570] sm:$0xff]
    %v229 = vld [vmem:[%s1 + $0x578] sm:$0xff]
    %v230 = vld [vmem:[%s1 + $0x580] sm:$0xff]
    %v231 = vld [vmem:[%s1 + $0x588] sm:$0xff]
    %v232 = vld [vmem:[%s1 + $0x590] sm:$0xff]
    %v233 = vld [vmem:[%s1 + $0x598] sm:$0xff]
    %v234 = vld [vmem:[%s1 + $0x5a0] sm:$0xff]
    %v235 = vld [vmem:[%s1 + $0x5a8] sm:$0xff]
    %v236 = vld [vmem:[%s1 + $0x5b0] sm:$0xff]
    %v237 = vld [vmem:[%s1 + $0x5b8] sm:$0xff]
    %v238 = vld [vmem:[%s1 + $0x5c0] sm:$0xff]
    %v239 = vld [vmem:[%s1 + $0x5c8] sm:$0xff]
    %v240 = vld [vmem:[%s1 + $0x5d0] sm:$0xff]
    %v241 = vld [vmem:[%s1 + $0x5d8] sm:$0xff]
    %v242 = vld [vmem:[%s1 + $0x5e0] sm:$0xff]
    %v243 = vld [vmem:[%s1 + $0x5e8] sm:$0xff]
    %v244 = vld [vmem:[%s1 + $0x5f0] sm:$0xff]
    %v245 = vld [vmem:[%s1 + $0x5f8] sm:$0xff]
    %v246 = vld [vmem:[%s1 + $0x600] sm:$0xff]
    %v247 = vld [vmem:[%s1 + $0x608] sm:$0xff]
    %v248 = vld [vmem:[%s1 + $0x610] sm:$0xff]
    %v249 = vld [vmem:[%s1 + $0x618] sm:$0xff]
    %v250 = vld [vmem:[%s1 + $0x620] sm:$0xff]
    %v251 = vld [vmem:[%s1 + $0x628] sm:$0xff]
    %v252 = vld [vmem:[%s1 + $0x630] sm:$0xff]
    %v253 = vld [vmem:[%s1 + $0x638] sm:$0xff]
    %v254 = vld [vmem:[%s1 + $0x640] sm:$0xff]
    %v255 = vld [vmem:[%s1 + $0x648] sm:$0xff]
    %v256 = vld [vmem:[%s1 + $0x650] sm:$0xff]
    %v257 = vld [vmem:[%s1 + $0x658] sm:$0xff]
    %v258 = vld [vmem:[%s1 + $0x660] sm:$0xff]
    %v259 = vld [vmem:[%s1 + $0x668] sm:$0xff]
    %v260 = vld [vmem:[%s1 + $0x670] sm:$0xff]
    %v261 = vld [vmem:[%s1 + $0x678] sm:$0xff]
    %v262 = vld [vmem:[%s1 + $0x680] sm:$0xff]
    %v263 = vld [vmem:[%s1 + $0x688] sm:$0xff]
    %v264 = vld [vmem:[%s1 + $0x690] sm:$0xff]
    %v265 = vld [vmem:[%s1 + $0x698] sm:$0xff]
    %v266 = vld [vmem:[%s1 + $0x6a0] sm:$0xff]
    %v267 = vld [vmem:[%s1 + $0x6a8] sm:$0xff]
    %v268 = vld [vmem:[%s1 + $0x6b0] sm:$0xff]
    %v269 = vld [vmem:[%s1 + $0x6b8] sm:$0xff]
    %v270 = vld [vmem:[%s1 + $0x6c0] sm:$0xff]
    %v271 = vld [vmem:[%s1 + $0x6c8] sm:$0xff]
    %v272 = vld [vmem:[%s1 + $0x6d0] sm:$0xff]
    %v273 = vld [vmem:[%s1 + $0x6d8] sm:$0xff]
    %v274 = vld [vmem:[%s1 + $0x6e0] sm:$0xff]
    %v275 = vld [vmem:[%s1 + $0x6e8] sm:$0xff]
    %v276 = vld [vmem:[%s1 + $0x6f0] sm:$0xff]
    %v277 = vld [vmem:[%s1 + $0x6f8] sm:$0xff]
    %v278 = vld [vmem:[%s1 + $0x700] sm:$0xff]
    %v279 = vld [vmem:[%s1 + $0x708] sm:$0xff]
    %v280 = vld [vmem:[%s1 + $0x710] sm:$0xff]
    %v281 = vld [vmem:[%s1 + $0x718] sm:$0xff]
    %v282 = vld [vmem:[%s1 + $0x720] sm:$0xff]
    %v283 = vld [vmem:[%s1 + $0x728] sm:$0xff]
    %v284 = vld [vmem:[%s1 + $0x730] sm:$0xff]
    %v285 = vld [vmem:[%s1 + $0x738] sm:$0xff]
    %v286 = vld [vmem:[%s1 + $0x740] sm:$0xff]
    %v287 = vld [vmem:[%s1 + $0x748] sm:$0xff]
    %v288 = vld [vmem:[%s1 + $0x750] sm:$0xff]
    %v289 = vld [vmem:[%s1 + $0x758] sm:$0xff]
    %v290 = vld [vmem:[%s1 + $0x760] sm:$0xff]
    %v291 = vld [vmem:[%s1 + $0x768] sm:$0xff]
    %v292 = vld [vmem:[%s1 + $0x770] sm:$0xff]
    %v293 = vld [vmem:[%s1 + $0x778] sm:$0xff]
    %v294 = vld [vmem:[%s1 + $0x780] sm:$0xff]
    %v295 = vld [vmem:[%s1 + $0x788] sm:$0xff]
    %v296 = vld [vmem:[%s1 + $0x790] sm:$0xff]
    %v297 = vld [vmem:[%s1 + $0x798] sm:$0xff]
    %v298 = vld [vmem:[%s1 + $0x7a0] sm:$0xff]
    %v299 = vld [vmem:[%s1 + $0x7a8] sm:$0xff]
    %v300 = vld [vmem:[%s1 + $0x7b0] sm:$0xff]
    %v301 = vld [vmem:[%s1 + $0x7b8] sm:$0xff]
    %v302 = vld [vmem:[%s1 + $0x7c0] sm:$0xff]
    %v303 = vld [vmem:[%s1 + $0x7c8] sm:$0xff]
    %v304 = vld [vmem:[%s1 + $0x7d0] sm:$0xff]
    %v305 = vld [vmem:[%s1 + $0x7d8] sm:$0xff]
    %v306 = vld [vmem:[%s1 + $0x7e0] sm:$0xff]
    %v307 = vld [vmem:[%s1 + $0x7e8] sm:$0xff]
    %v308 = vld [vmem:[%s1 + $0x7f0] sm:$0xff]
    %v309 = vld [vmem:[%s1 + $0x7f8] sm:$0xff]
    %v310 = vld [vmem:[%s1 + $0x800] sm:$0xff]
    %v311 = vld [vmem:[%s1 + $0x808] sm:$0xff]
    %v312 = vld [vmem:[%s1 + $0x810] sm:$0xff]
    %v313 = vld [vmem:[%s1 + $0x818] sm:$0xff]
    %v314 = vld [vmem:[%s1 + $0x820] sm:$0xff]
    %v315 = vld [vmem:[%s1 + $0x828] sm:$0xff]
    %v316 = vld [vmem:[%s1 + $0x830] sm:$0xff]
    %v317 = vld [vmem:[%s1 + $0x838] sm:$0xff]
    %v318 = vld [vmem:[%s1 + $0x840] sm:$0xff]
    %v319 = vld [vmem:[%s1 + $0x848] sm:$0xff]
    %v320 = vld [vmem:[%s1 + $0x850] sm:$0xff]
    %v321 = vld [vmem:[%s1 + $0x858] sm:$0xff]
    %v322 = vld [vmem:[%s1 + $0x860] sm:$0xff]
    %v323 = vld [vmem:[%s1 + $0x868] sm:$0xff]
    %v324 = vld [vmem:[%s1 + $0x870] sm:$0xff]
    %v325 = vld [vmem:[%s1 + $0x878] sm:$0xff]
    %v326 = vld [vmem:[%s1 + $0x880] sm:$0xff]
    %v327 = vld [vmem:[%s1 + $0x888] sm:$0xff]
    %v328 = vld [vmem:[%s1 + $0x890] sm:$0xff]
    %v329 = vld [vmem:[%s1 + $0x898] sm:$0xff]
    %v330 = vld [vmem:[%s1 + $0x8a0] sm:$0xff]
    %v331 = vld [vmem:[%s1 + $0x8a8] sm:$0xff]
    %v332 = vld [vmem:[%s1 + $0x8b0] sm:$0xff]
    %v333 = vld [vmem:[%s1 + $0x8b8] sm:$0xff]
    %v334 = vld [vmem:[%s1 + $0x8c0] sm:$0xff]
    %v335 = vld [vmem:[%s1 + $0x8c8] sm:$0xff]
    %v336 = vld [vmem:[%s1 + $0x8d0] sm:$0xff]
    %v337 = vld [vmem:[%s1 + $0x8d8] sm:$0xff]
    %v338 = vld [vmem:[%s1 + $0x8e0] sm:$0xff]
    %v339 = vld [vmem:[%s1 + $0x8e8] sm:$0xff]
    %v340 = vld [vmem:[%s1 + $0x8f0] sm:$0xff]
    %v341 = vld [vmem:[%s1 + $0x8f8] sm:$0xff]
    %v342 = vld [vmem:[%s1 + $0x900] sm:$0xff]
    %v343 = vld [vmem:[%s1 + $0x908] sm:$0xff]
    %v344 = vld [vmem:[%s1 + $0x910] sm:$0xff]
    %v345 = vld [vmem:[%s1 + $0x918] sm:$0xff]
    %v346 = vld [vmem:[%s1 + $0x920] sm:$0xff]
    %v347 = vld [vmem:[%s1 + $0x928] sm:$0xff]
    %v348 = vld [vmem:[%s1 + $0x930] sm:$0xff]
    %v349 = vld [vmem:[%s1 + $0x938] sm:$0xff]
    %v350 = vld [vmem:[%s1 + $0x940] sm:$0xff]
    %v351 = vld [vmem:[%s1 + $0x948] sm:$0xff]
    %v352 = vld [vmem:[%s1 + $0x950] sm:$0xff]
    %v353 = vld [vmem:[%s1 + $0x958] sm:$0xff]
    %v354 = vld [vmem:[%s1 + $0x960] sm:$0xff]
    %v355 = vld [vmem:[%s1 + $0x968] sm:$0xff]
    %v356 = vld [vmem:[%s1 + $0x970] sm:$0xff]
    %v357 = vld [vmem:[%s1 + $0x978] sm:$0xff]
    %v358 = vld [vmem:[%s1 + $0x980] sm:$0xff]
    %v359 = vld [vmem:[%s1 + $0x988] sm:$0xff]
    %v360 = vld [vmem:[%s1 + $0x990] sm:$0xff]
    %v361 = vld [vmem:[%s1 + $0x998] sm:$0xff]
    %v362 = vld [vmem:[%s1 + $0x9a0] sm:$0xff]
    %v363 = vld [vmem:[%s1 + $0x9a8] sm:$0xff]
    %v364 = vld [vmem:[%s1 + $0x9b0] sm:$0xff]
    %v365 = vld [vmem:[%s1 + $0x9b8] sm:$0xff]
    %v366 = vld [vmem:[%s1 + $0x9c0] sm:$0xff]
    %v367 = vld [vmem:[%s1 + $0x9c8] sm:$0xff]
    %v368 = vld [vmem:[%s1 + $0x9d0] sm:$0xff]
    %v369 = vld [vmem:[%s1 + $0x9d8] sm:$0xff]
    %v370 = vld [vmem:[%s1 + $0x9e0] sm:$0xff]
    %v371 = vld [vmem:[%s1 + $0x9e8] sm:$0xff]
    %v372 = vld [vmem:[%s1 + $0x9f0] sm:$0xff]
    %v373 = vld [vmem:[%s1 + $0x9f8] sm:$0xff]
    %v374 = vld [vmem:[%s1 + $0xa00] sm:$0xff]
    %v375 = vld [vmem:[%s1 + $0xa08] sm:$0xff]
    %v376 = vld [vmem:[%s1 + $0xa10] sm:$0xff]
    %v377 = vld [vmem:[%s1 + $0xa18] sm:$0xff]
    %v378 = vld [vmem:[%s1 + $0xa20] sm:$0xff]
    %v379 = vld [vmem:[%s1 + $0xa28] sm:$0xff]
    %v380 = vld [vmem:[%s1 + $0xa30] sm:$0xff]
    %v381 = vld [vmem:[%s1 + $0xa38] sm:$0xff]
    %v382 = vld [vmem:[%s1 + $0xa40] sm:$0xff]
    %v383 = vld [vmem:[%s1 + $0xa48] sm:$0xff]
    %v384 = vld [vmem:[%s1 + $0xa50] sm:$0xff]
    %v385 = vld [vmem:[%s1 + $0xa58] sm:$0xff]
    %v386 = vld [vmem:[%s1 + $0xa60] sm:$0xff]
    %v387 = vld [vmem:[%s1 + $0xa68] sm:$0xff]
    %v388 = vld [vmem:[%s1 + $0xa70] sm:$0xff]
    %v389 = vld [vmem:[%s1 + $0xa78] sm:$0xff]
    %v390 = vld [vmem:[%s1 + $0xa80] sm:$0xff]
    %v391 = vld [vmem:[%s1 + $0xa88] sm:$0xff]
    %v392 = vld [vmem:[%s1 + $0xa90] sm:$0xff]
    %v393 = vld [vmem:[%s1 + $0xa98] sm:$0xff]
    %v394 = vld [vmem:[%s1 + $0xaa0] sm:$0xff]
    %v395 = vld [vmem:[%s1 + $0xaa8] sm:$0xff]
    %v396 = vld [vmem:[%s1 + $0xab0] sm:$0xff]
    %v397 = vld [vmem:[%s1 + $0xab8] sm:$0xff]
    %v398 = vld [vmem:[%s1 + $0xac0] sm:$0xff]
    %v399 = vld [vmem:[%s1 + $0xac8] sm:$0xff]
    %v400 = vld [vmem:[%s1 + $0xad0] sm:$0xff]
    %v401 = vld [vmem:[%s1 + $0xad8] sm:$0xff]
    %v402 = vld [vmem:[%s1 + $0xae0] sm:$0xff]
    %v403 = vld [vmem:[%s1 + $0xae8] sm:$0xff]
    %v404 = vld [vmem:[%s1 + $0xaf0] sm:$0xff]
    %v405 = vld [vmem:[%s1 + $0xaf8] sm:$0xff]
    %v406 = vld [vmem:[%s1 + $0xb00] sm:$0xff]
    %v407 = vld [vmem:[%s1 + $0xb08] sm:$0xff]
    %v408 = vld [vmem:[%s1 + $0xb10] sm:$0xff]
    %v409 = vld [vmem:[%s1 + $0xb18] sm:$0xff]
    %v410 = vld [vmem:[%s1 + $0xb20] sm:$0xff]
    %v411 = vld [vmem:[%s1 + $0xb28] sm:$0xff]
    %v412 = vld [vmem:[%s1 + $0xb30] sm:$0xff]
    %v413 = vld [vmem:[%s1 + $0xb38] sm:$0xff]
    %v414 = vld [vmem:[%s1 + $0xb40] sm:$0xff]
    %v415 = vld [vmem:[%s1 + $0xb48] sm:$0xff]
    %v416 = vld [vmem:[%s1 + $0xb50] sm:$0xff]
    %v417 = vld [vmem:[%s1 + $0xb58] sm:$0xff]
    %v418 = vld [vmem:[%s1 + $0xb60] sm:$0xff]
    %v419 = vld [vmem:[%s1 + $0xb68] sm:$0xff]
    %v420 = vld [vmem:[%s1 + $0xb70] sm:$0xff]
    %v421 = vld [vmem:[%s1 + $0xb78] sm:$0xff]
    %v422 = vld [vmem:[%s1 + $0xb80] sm:$0xff]
    %v423 = vld [vmem:[%s1 + $0xb88] sm:$0xff]
    %v424 = vld [vmem:[%s1 + $0xb90] sm:$0xff]
    %v425 = vld [vmem:[%s1 + $0xb98] sm:$0xff]
    %v426 = vld [vmem:[%s1 + $0xba0] sm:$0xff]
    %v427 = vld [vmem:[%s1 + $0xba8] sm:$0xff]
    %v428 = vld [vmem:[%s1 + $0xbb0] sm:$0xff]
    %v429 = vld [vmem:[%s1 + $0xbb8] sm:$0xff]
    %v430 = vld [vmem:[%s1 + $0xbc0] sm:$0xff]
    %v431 = vld [vmem:[%s1 + $0xbc8] sm:$0xff]
    %v432 = vld [vmem:[%s1 + $0xbd0] sm:$0xff]
    %v433 = vld [vmem:[%s1 + $0xbd8] sm:$0xff]
    %v434 = vld [vmem:[%s1 + $0xbe0] sm:$0xff]
    %v435 = vld [vmem:[%s1 + $0xbe8] sm:$0xff]
    %v436 = vld [vmem:[%s1 + $0xbf0] sm:$0xff]
    %v437 = vld [vmem:[%s1 + $0xbf8] sm:$0xff]
    %v438 = vld [vmem:[%s1 + $0xc00] sm:$0xff]
    %v439 = vld [vmem:[%s1 + $0xc08] sm:$0xff]
    %v440 = vld [vmem:[%s1 + $0xc10] sm:$0xff]
    %v441 = vld [vmem:[%s1 + $0xc18] sm:$0xff]
    %v442 = vld [vmem:[%s1 + $0xc20] sm:$0xff]
    %v443 = vld [vmem:[%s1 + $0xc28] sm:$0xff]
    %v444 = vld [vmem:[%s1 + $0xc30] sm:$0xff]
    %v445 = vld [vmem:[%s1 + $0xc38] sm:$0xff]
    %v446 = vld [vmem:[%s1 + $0xc40] sm:$0xff]
    %v447 = vld [vmem:[%s1 + $0xc48] sm:$0xff]
    %v448 = vld [vmem:[%s1 + $0xc50] sm:$0xff]
    %v449 = vld [vmem:[%s1 + $0xc58] sm:$0xff]
    %v450 = vld [vmem:[%s1 + $0xc60] sm:$0xff]
    %v451 = vld [vmem:[%s1 + $0xc68] sm:$0xff]
    %v452 = vld [vmem:[%s1 + $0xc70] sm:$0xff]
    %v453 = vld [vmem:[%s1 + $0xc78] sm:$0xff]
    %v454 = vld [vmem:[%s2] sm:$0xf]
    %v456 = vlaneseq
    %v457 = vshrl.u32 %v456, 7
    %v458 = vsub.s32 0, %v457
    %v459 = vrot.slane %v454, %v458
    %v460 = vlaneseq
    %v461 = vshrl.u32 %v460, 7
    %v462 = vsub.s32 1, %v461
    %v463 = vrot.slane %v454, %v462
    %v464 = vlaneseq
    %v465 = vshrl.u32 %v464, 7
    %v466 = vsub.s32 2, %v465
    %v467 = vrot.slane %v454, %v466
    %v468 = vlaneseq
    %v469 = vshrl.u32 %v468, 7
    %v470 = vsub.s32 3, %v469
    %v471 = vrot.slane %v454, %v470
    %v876 = vunpack.c.l.b16 %v54
    %v877 = vunpack.c.h.b16 %v54
    %v878 = vunpack.c.l.b16 %v55
    %v879 = vunpack.c.h.b16 %v55
    %v880 = vunpack.c.l.b16 %v56
    %v881 = vunpack.c.h.b16 %v56
    %v882 = vunpack.c.l.b16 %v57
    %v883 = vunpack.c.h.b16 %v57
    %v884 = vunpack.c.l.b16 %v58
    %v885 = vunpack.c.h.b16 %v58
    %v886 = vunpack.c.l.b16 %v59
    %v887 = vunpack.c.h.b16 %v59
    %v888 = vunpack.c.l.b16 %v60
    %v889 = vunpack.c.h.b16 %v60
    %v890 = vunpack.c.l.b16 %v61
    %v891 = vunpack.c.h.b16 %v61
    %v892 = vunpack.c.l.b16 %v62
    %v893 = vunpack.c.h.b16 %v62
    %v894 = vunpack.c.l.b16 %v63
    %v895 = vunpack.c.h.b16 %v63
    %v896 = vunpack.c.l.b16 %v64
    %v897 = vunpack.c.h.b16 %v64
    %v898 = vunpack.c.l.b16 %v65
    %v899 = vunpack.c.h.b16 %v65
    %v900 = vunpack.c.l.b16 %v66
    %v901 = vunpack.c.h.b16 %v66
    %v902 = vunpack.c.l.b16 %v67
    %v903 = vunpack.c.h.b16 %v67
    %v904 = vunpack.c.l.b16 %v68
    %v905 = vunpack.c.h.b16 %v68
    %v906 = vunpack.c.l.b16 %v69
    %v907 = vunpack.c.h.b16 %v69
    %v908 = vunpack.c.l.b16 %v70
    %v909 = vunpack.c.h.b16 %v70
    %v910 = vunpack.c.l.b16 %v71
    %v911 = vunpack.c.h.b16 %v71
    %v912 = vunpack.c.l.b16 %v72
    %v913 = vunpack.c.h.b16 %v72
    %v914 = vunpack.c.l.b16 %v73
    %v915 = vunpack.c.h.b16 %v73
    %v916 = vunpack.c.l.b16 %v74
    %v917 = vunpack.c.h.b16 %v74
    %v918 = vunpack.c.l.b16 %v75
    %v919 = vunpack.c.h.b16 %v75
    %v920 = vunpack.c.l.b16 %v76
    %v921 = vunpack.c.h.b16 %v76
    %v922 = vunpack.c.l.b16 %v77
    %v923 = vunpack.c.h.b16 %v77
    %v924 = vunpack.c.l.b16 %v78
    %v925 = vunpack.c.h.b16 %v78
    %v926 = vunpack.c.l.b16 %v79
    %v927 = vunpack.c.h.b16 %v79
    %v928 = vunpack.c.l.b16 %v80
    %v929 = vunpack.c.h.b16 %v80
    %v930 = vunpack.c.l.b16 %v81
    %v931 = vunpack.c.h.b16 %v81
    %v932 = vunpack.c.l.b16 %v82
    %v933 = vunpack.c.h.b16 %v82
    %v934 = vunpack.c.l.b16 %v83
    %v935 = vunpack.c.h.b16 %v83
    %v936 = vunpack.c.l.b16 %v84
    %v937 = vunpack.c.h.b16 %v84
    %v938 = vunpack.c.l.b16 %v85
    %v939 = vunpack.c.h.b16 %v85
    %v940 = vunpack.c.l.b16 %v86
    %v941 = vunpack.c.h.b16 %v86
    %v942 = vunpack.c.l.b16 %v87
    %v943 = vunpack.c.h.b16 %v87
    %v944 = vunpack.c.l.b16 %v88
    %v945 = vunpack.c.h.b16 %v88
    %v946 = vunpack.c.l.b16 %v89
    %v947 = vunpack.c.h.b16 %v89
    %v948 = vunpack.c.l.b16 %v90
    %v949 = vunpack.c.h.b16 %v90
    %v950 = vunpack.c.l.b16 %v91
    %v951 = vunpack.c.h.b16 %v91
    %v952 = vunpack.c.l.b16 %v92
    %v953 = vunpack.c.h.b16 %v92
    %v954 = vunpack.c.l.b16 %v93
    %v955 = vunpack.c.h.b16 %v93
    %v956 = vunpack.c.l.b16 %v94
    %v957 = vunpack.c.h.b16 %v94
    %v958 = vunpack.c.l.b16 %v95
    %v959 = vunpack.c.h.b16 %v95
    %v960 = vunpack.c.l.b16 %v96
    %v961 = vunpack.c.h.b16 %v96
    %v962 = vunpack.c.l.b16 %v97
    %v963 = vunpack.c.h.b16 %v97
    %v964 = vunpack.c.l.b16 %v98
    %v965 = vunpack.c.h.b16 %v98
    %v966 = vunpack.c.l.b16 %v99
    %v967 = vunpack.c.h.b16 %v99
    %v968 = vunpack.c.l.b16 %v100
    %v969 = vunpack.c.h.b16 %v100
    %v970 = vunpack.c.l.b16 %v101
    %v971 = vunpack.c.h.b16 %v101
    %v972 = vunpack.c.l.b16 %v102
    %v973 = vunpack.c.h.b16 %v102
    %v974 = vunpack.c.l.b16 %v103
    %v975 = vunpack.c.h.b16 %v103
    %v976 = vunpack.c.l.b16 %v104
    %v977 = vunpack.c.h.b16 %v104
    %v978 = vunpack.c.l.b16 %v105
    %v979 = vunpack.c.h.b16 %v105
    %v980 = vunpack.c.l.b16 %v106
    %v981 = vunpack.c.h.b16 %v106
    %v982 = vunpack.c.l.b16 %v107
    %v983 = vunpack.c.h.b16 %v107
    %v984 = vunpack.c.l.b16 %v108
    %v985 = vunpack.c.h.b16 %v108
    %v986 = vunpack.c.l.b16 %v109
    %v987 = vunpack.c.h.b16 %v109
    %v988 = vunpack.c.l.b16 %v110
    %v989 = vunpack.c.h.b16 %v110
    %v990 = vunpack.c.l.b16 %v111
    %v991 = vunpack.c.h.b16 %v111
    %v992 = vunpack.c.l.b16 %v112
    %v993 = vunpack.c.h.b16 %v112
    %v994 = vunpack.c.l.b16 %v113
    %v995 = vunpack.c.h.b16 %v113
    %v996 = vunpack.c.l.b16 %v114
    %v997 = vunpack.c.h.b16 %v114
    %v998 = vunpack.c.l.b16 %v115
    %v999 = vunpack.c.h.b16 %v115
    %v1000 = vunpack.c.l.b16 %v116
    %v1001 = vunpack.c.h.b16 %v116
    %v1002 = vunpack.c.l.b16 %v117
    %v1003 = vunpack.c.h.b16 %v117
    %v1004 = vunpack.c.l.b16 %v118
    %v1005 = vunpack.c.h.b16 %v118
    %v1006 = vunpack.c.l.b16 %v119
    %v1007 = vunpack.c.h.b16 %v119
    %v1008 = vunpack.c.l.b16 %v120
    %v1009 = vunpack.c.h.b16 %v120
    %v1010 = vunpack.c.l.b16 %v121
    %v1011 = vunpack.c.h.b16 %v121
    %v1012 = vunpack.c.l.b16 %v122
    %v1013 = vunpack.c.h.b16 %v122
    %v1014 = vunpack.c.l.b16 %v123
    %v1015 = vunpack.c.h.b16 %v123
    %v1016 = vunpack.c.l.b16 %v124
    %v1017 = vunpack.c.h.b16 %v124
    %v1018 = vunpack.c.l.b16 %v125
    %v1019 = vunpack.c.h.b16 %v125
    %v1020 = vunpack.c.l.b16 %v126
    %v1021 = vunpack.c.h.b16 %v126
    %v1022 = vunpack.c.l.b16 %v127
    %v1023 = vunpack.c.h.b16 %v127
    %v1024 = vunpack.c.l.b16 %v128
    %v1025 = vunpack.c.h.b16 %v128
    %v1026 = vunpack.c.l.b16 %v129
    %v1027 = vunpack.c.h.b16 %v129
    %v1028 = vunpack.c.l.b16 %v130
    %v1029 = vunpack.c.h.b16 %v130
    %v1030 = vunpack.c.l.b16 %v131
    %v1031 = vunpack.c.h.b16 %v131
    %v1032 = vunpack.c.l.b16 %v132
    %v1033 = vunpack.c.h.b16 %v132
    %v1034 = vunpack.c.l.b16 %v133
    %v1035 = vunpack.c.h.b16 %v133
    %v1036 = vunpack.c.l.b16 %v134
    %v1037 = vunpack.c.h.b16 %v134
    %v1038 = vunpack.c.l.b16 %v135
    %v1039 = vunpack.c.h.b16 %v135
    %v1040 = vunpack.c.l.b16 %v136
    %v1041 = vunpack.c.h.b16 %v136
    %v1042 = vunpack.c.l.b16 %v137
    %v1043 = vunpack.c.h.b16 %v137
    %v1044 = vunpack.c.l.b16 %v138
    %v1045 = vunpack.c.h.b16 %v138
    %v1046 = vunpack.c.l.b16 %v139
    %v1047 = vunpack.c.h.b16 %v139
    %v1048 = vunpack.c.l.b16 %v140
    %v1049 = vunpack.c.h.b16 %v140
    %v1050 = vunpack.c.l.b16 %v141
    %v1051 = vunpack.c.h.b16 %v141
    %v1052 = vunpack.c.l.b16 %v142
    %v1053 = vunpack.c.h.b16 %v142
    %v1054 = vunpack.c.l.b16 %v143
    %v1055 = vunpack.c.h.b16 %v143
    %v1056 = vunpack.c.l.b16 %v144
    %v1057 = vunpack.c.h.b16 %v144
    %v1058 = vunpack.c.l.b16 %v145
    %v1059 = vunpack.c.h.b16 %v145
    %v1060 = vunpack.c.l.b16 %v146
    %v1061 = vunpack.c.h.b16 %v146
    %v1062 = vunpack.c.l.b16 %v147
    %v1063 = vunpack.c.h.b16 %v147
    %v1064 = vunpack.c.l.b16 %v148
    %v1065 = vunpack.c.h.b16 %v148
    %v1066 = vunpack.c.l.b16 %v149
    %v1067 = vunpack.c.h.b16 %v149
    %v1068 = vunpack.c.l.b16 %v150
    %v1069 = vunpack.c.h.b16 %v150
    %v1070 = vunpack.c.l.b16 %v151
    %v1071 = vunpack.c.h.b16 %v151
    %v1072 = vunpack.c.l.b16 %v152
    %v1073 = vunpack.c.h.b16 %v152
    %v1074 = vunpack.c.l.b16 %v153
    %v1075 = vunpack.c.h.b16 %v153
    %v1076 = vunpack.c.l.b16 %v154
    %v1077 = vunpack.c.h.b16 %v154
    %v1078 = vunpack.c.l.b16 %v155
    %v1079 = vunpack.c.h.b16 %v155
    %v1080 = vunpack.c.l.b16 %v156
    %v1081 = vunpack.c.h.b16 %v156
    %v1082 = vunpack.c.l.b16 %v157
    %v1083 = vunpack.c.h.b16 %v157
    %v1084 = vunpack.c.l.b16 %v158
    %v1085 = vunpack.c.h.b16 %v158
    %v1086 = vunpack.c.l.b16 %v159
    %v1087 = vunpack.c.h.b16 %v159
    %v1088 = vunpack.c.l.b16 %v160
    %v1089 = vunpack.c.h.b16 %v160
    %v1090 = vunpack.c.l.b16 %v161
    %v1091 = vunpack.c.h.b16 %v161
    %v1092 = vunpack.c.l.b16 %v162
    %v1093 = vunpack.c.h.b16 %v162
    %v1094 = vunpack.c.l.b16 %v163
    %v1095 = vunpack.c.h.b16 %v163
    %v1096 = vunpack.c.l.b16 %v164
    %v1097 = vunpack.c.h.b16 %v164
    %v1098 = vunpack.c.l.b16 %v165
    %v1099 = vunpack.c.h.b16 %v165
    %v1100 = vunpack.c.l.b16 %v166
    %v1101 = vunpack.c.h.b16 %v166
    %v1102 = vunpack.c.l.b16 %v167
    %v1103 = vunpack.c.h.b16 %v167
    %v1104 = vunpack.c.l.b16 %v168
    %v1105 = vunpack.c.h.b16 %v168
    %v1106 = vunpack.c.l.b16 %v169
    %v1107 = vunpack.c.h.b16 %v169
    %v1108 = vunpack.c.l.b16 %v170
    %v1109 = vunpack.c.h.b16 %v170
    %v1110 = vunpack.c.l.b16 %v171
    %v1111 = vunpack.c.h.b16 %v171
    %v1112 = vunpack.c.l.b16 %v172
    %v1113 = vunpack.c.h.b16 %v172
    %v1114 = vunpack.c.l.b16 %v173
    %v1115 = vunpack.c.h.b16 %v173
    %v1116 = vunpack.c.l.b16 %v174
    %v1117 = vunpack.c.h.b16 %v174
    %v1118 = vunpack.c.l.b16 %v175
    %v1119 = vunpack.c.h.b16 %v175
    %v1120 = vunpack.c.l.b16 %v176
    %v1121 = vunpack.c.h.b16 %v176
    %v1122 = vunpack.c.l.b16 %v177
    %v1123 = vunpack.c.h.b16 %v177
    %v1124 = vunpack.c.l.b16 %v178
    %v1125 = vunpack.c.h.b16 %v178
    %v1126 = vunpack.c.l.b16 %v179
    %v1127 = vunpack.c.h.b16 %v179
    %v1128 = vunpack.c.l.b16 %v180
    %v1129 = vunpack.c.h.b16 %v180
    %v1130 = vunpack.c.l.b16 %v181
    %v1131 = vunpack.c.h.b16 %v181
    %v1132 = vunpack.c.l.b16 %v182
    %v1133 = vunpack.c.h.b16 %v182
    %v1134 = vunpack.c.l.b16 %v183
    %v1135 = vunpack.c.h.b16 %v183
    %v1136 = vunpack.c.l.b16 %v184
    %v1137 = vunpack.c.h.b16 %v184
    %v1138 = vunpack.c.l.b16 %v185
    %v1139 = vunpack.c.h.b16 %v185
    %v1140 = vunpack.c.l.b16 %v186
    %v1141 = vunpack.c.h.b16 %v186
    %v1142 = vunpack.c.l.b16 %v187
    %v1143 = vunpack.c.h.b16 %v187
    %v1144 = vunpack.c.l.b16 %v188
    %v1145 = vunpack.c.h.b16 %v188
    %v1146 = vunpack.c.l.b16 %v189
    %v1147 = vunpack.c.h.b16 %v189
    %v1148 = vunpack.c.l.b16 %v190
    %v1149 = vunpack.c.h.b16 %v190
    %v1150 = vunpack.c.l.b16 %v191
    %v1151 = vunpack.c.h.b16 %v191
    %v1152 = vunpack.c.l.b16 %v192
    %v1153 = vunpack.c.h.b16 %v192
    %v1154 = vunpack.c.l.b16 %v193
    %v1155 = vunpack.c.h.b16 %v193
    %v1156 = vunpack.c.l.b16 %v194
    %v1157 = vunpack.c.h.b16 %v194
    %v1158 = vunpack.c.l.b16 %v195
    %v1159 = vunpack.c.h.b16 %v195
    %v1160 = vunpack.c.l.b16 %v196
    %v1161 = vunpack.c.h.b16 %v196
    %v1162 = vunpack.c.l.b16 %v197
    %v1163 = vunpack.c.h.b16 %v197
    %v1164 = vunpack.c.l.b16 %v198
    %v1165 = vunpack.c.h.b16 %v198
    %v1166 = vunpack.c.l.b16 %v199
    %v1167 = vunpack.c.h.b16 %v199
    %v1168 = vunpack.c.l.b16 %v200
    %v1169 = vunpack.c.h.b16 %v200
    %v1170 = vunpack.c.l.b16 %v201
    %v1171 = vunpack.c.h.b16 %v201
    %v1172 = vunpack.c.l.b16 %v202
    %v1173 = vunpack.c.h.b16 %v202
    %v1174 = vunpack.c.l.b16 %v203
    %v1175 = vunpack.c.h.b16 %v203
    %v1176 = vunpack.c.l.b16 %v204
    %v1177 = vunpack.c.h.b16 %v204
    %v1178 = vunpack.c.l.b16 %v205
    %v1179 = vunpack.c.h.b16 %v205
    %v1180 = vunpack.c.l.b16 %v206
    %v1181 = vunpack.c.h.b16 %v206
    %v1182 = vunpack.c.l.b16 %v207
    %v1183 = vunpack.c.h.b16 %v207
    %v1184 = vunpack.c.l.b16 %v208
    %v1185 = vunpack.c.h.b16 %v208
    %v1186 = vunpack.c.l.b16 %v209
    %v1187 = vunpack.c.h.b16 %v209
    %v1188 = vunpack.c.l.b16 %v210
    %v1189 = vunpack.c.h.b16 %v210
    %v1190 = vunpack.c.l.b16 %v211
    %v1191 = vunpack.c.h.b16 %v211
    %v1192 = vunpack.c.l.b16 %v212
    %v1193 = vunpack.c.h.b16 %v212
    %v1194 = vunpack.c.l.b16 %v213
    %v1195 = vunpack.c.h.b16 %v213
    %v1196 = vunpack.c.l.b16 %v214
    %v1197 = vunpack.c.h.b16 %v214
    %v1198 = vunpack.c.l.b16 %v215
    %v1199 = vunpack.c.h.b16 %v215
    %v1200 = vunpack.c.l.b16 %v216
    %v1201 = vunpack.c.h.b16 %v216
    %v1202 = vunpack.c.l.b16 %v217
    %v1203 = vunpack.c.h.b16 %v217
    %v1204 = vunpack.c.l.b16 %v218
    %v1205 = vunpack.c.h.b16 %v218
    %v1206 = vunpack.c.l.b16 %v219
    %v1207 = vunpack.c.h.b16 %v219
    %v1208 = vunpack.c.l.b16 %v220
    %v1209 = vunpack.c.h.b16 %v220
    %v1210 = vunpack.c.l.b16 %v221
    %v1211 = vunpack.c.h.b16 %v221
    %v1212 = vunpack.c.l.b16 %v222
    %v1213 = vunpack.c.h.b16 %v222
    %v1214 = vunpack.c.l.b16 %v223
    %v1215 = vunpack.c.h.b16 %v223
    %v1216 = vunpack.c.l.b16 %v224
    %v1217 = vunpack.c.h.b16 %v224
    %v1218 = vunpack.c.l.b16 %v225
    %v1219 = vunpack.c.h.b16 %v225
    %v1220 = vunpack.c.l.b16 %v226
    %v1221 = vunpack.c.h.b16 %v226
    %v1222 = vunpack.c.l.b16 %v227
    %v1223 = vunpack.c.h.b16 %v227
    %v1224 = vunpack.c.l.b16 %v228
    %v1225 = vunpack.c.h.b16 %v228
    %v1226 = vunpack.c.l.b16 %v229
    %v1227 = vunpack.c.h.b16 %v229
    %v1228 = vunpack.c.l.b16 %v230
    %v1229 = vunpack.c.h.b16 %v230
    %v1230 = vunpack.c.l.b16 %v231
    %v1231 = vunpack.c.h.b16 %v231
    %v1232 = vunpack.c.l.b16 %v232
    %v1233 = vunpack.c.h.b16 %v232
    %v1234 = vunpack.c.l.b16 %v233
    %v1235 = vunpack.c.h.b16 %v233
    %v1236 = vunpack.c.l.b16 %v234
    %v1237 = vunpack.c.h.b16 %v234
    %v1238 = vunpack.c.l.b16 %v235
    %v1239 = vunpack.c.h.b16 %v235
    %v1240 = vunpack.c.l.b16 %v236
    %v1241 = vunpack.c.h.b16 %v236
    %v1242 = vunpack.c.l.b16 %v237
    %v1243 = vunpack.c.h.b16 %v237
    %v1244 = vunpack.c.l.b16 %v238
    %v1245 = vunpack.c.h.b16 %v238
    %v1246 = vunpack.c.l.b16 %v239
    %v1247 = vunpack.c.h.b16 %v239
    %v1248 = vunpack.c.l.b16 %v240
    %v1249 = vunpack.c.h.b16 %v240
    %v1250 = vunpack.c.l.b16 %v241
    %v1251 = vunpack.c.h.b16 %v241
    %v1252 = vunpack.c.l.b16 %v242
    %v1253 = vunpack.c.h.b16 %v242
    %v1254 = vunpack.c.l.b16 %v243
    %v1255 = vunpack.c.h.b16 %v243
    %v1256 = vunpack.c.l.b16 %v244
    %v1257 = vunpack.c.h.b16 %v244
    %v1258 = vunpack.c.l.b16 %v245
    %v1259 = vunpack.c.h.b16 %v245
    %v1260 = vunpack.c.l.b16 %v246
    %v1261 = vunpack.c.h.b16 %v246
    %v1262 = vunpack.c.l.b16 %v247
    %v1263 = vunpack.c.h.b16 %v247
    %v1264 = vunpack.c.l.b16 %v248
    %v1265 = vunpack.c.h.b16 %v248
    %v1266 = vunpack.c.l.b16 %v249
    %v1267 = vunpack.c.h.b16 %v249
    %v1268 = vunpack.c.l.b16 %v250
    %v1269 = vunpack.c.h.b16 %v250
    %v1270 = vunpack.c.l.b16 %v251
    %v1271 = vunpack.c.h.b16 %v251
    %v1272 = vunpack.c.l.b16 %v252
    %v1273 = vunpack.c.h.b16 %v252
    %v1274 = vunpack.c.l.b16 %v253
    %v1275 = vunpack.c.h.b16 %v253
    %v1276 = vunpack.c.l.b16 %v254
    %v1277 = vunpack.c.h.b16 %v254
    %v1278 = vunpack.c.l.b16 %v255
    %v1279 = vunpack.c.h.b16 %v255
    %v1280 = vunpack.c.l.b16 %v256
    %v1281 = vunpack.c.h.b16 %v256
    %v1282 = vunpack.c.l.b16 %v257
    %v1283 = vunpack.c.h.b16 %v257
    %v1284 = vunpack.c.l.b16 %v258
    %v1285 = vunpack.c.h.b16 %v258
    %v1286 = vunpack.c.l.b16 %v259
    %v1287 = vunpack.c.h.b16 %v259
    %v1288 = vunpack.c.l.b16 %v260
    %v1289 = vunpack.c.h.b16 %v260
    %v1290 = vunpack.c.l.b16 %v261
    %v1291 = vunpack.c.h.b16 %v261
    %v1292 = vunpack.c.l.b16 %v262
    %v1293 = vunpack.c.h.b16 %v262
    %v1294 = vunpack.c.l.b16 %v263
    %v1295 = vunpack.c.h.b16 %v263
    %v1296 = vunpack.c.l.b16 %v264
    %v1297 = vunpack.c.h.b16 %v264
    %v1298 = vunpack.c.l.b16 %v265
    %v1299 = vunpack.c.h.b16 %v265
    %v1300 = vunpack.c.l.b16 %v266
    %v1301 = vunpack.c.h.b16 %v266
    %v1302 = vunpack.c.l.b16 %v267
    %v1303 = vunpack.c.h.b16 %v267
    %v1304 = vunpack.c.l.b16 %v268
    %v1305 = vunpack.c.h.b16 %v268
    %v1306 = vunpack.c.l.b16 %v269
    %v1307 = vunpack.c.h.b16 %v269
    %v1308 = vunpack.c.l.b16 %v270
    %v1309 = vunpack.c.h.b16 %v270
    %v1310 = vunpack.c.l.b16 %v271
    %v1311 = vunpack.c.h.b16 %v271
    %v1312 = vunpack.c.l.b16 %v272
    %v1313 = vunpack.c.h.b16 %v272
    %v1314 = vunpack.c.l.b16 %v273
    %v1315 = vunpack.c.h.b16 %v273
    %v1316 = vunpack.c.l.b16 %v274
    %v1317 = vunpack.c.h.b16 %v274
    %v1318 = vunpack.c.l.b16 %v275
    %v1319 = vunpack.c.h.b16 %v275
    %v1320 = vunpack.c.l.b16 %v276
    %v1321 = vunpack.c.h.b16 %v276
    %v1322 = vunpack.c.l.b16 %v277
    %v1323 = vunpack.c.h.b16 %v277
    %v1324 = vunpack.c.l.b16 %v278
    %v1325 = vunpack.c.h.b16 %v278
    %v1326 = vunpack.c.l.b16 %v279
    %v1327 = vunpack.c.h.b16 %v279
    %v1328 = vunpack.c.l.b16 %v280
    %v1329 = vunpack.c.h.b16 %v280
    %v1330 = vunpack.c.l.b16 %v281
    %v1331 = vunpack.c.h.b16 %v281
    %v1332 = vunpack.c.l.b16 %v282
    %v1333 = vunpack.c.h.b16 %v282
    %v1334 = vunpack.c.l.b16 %v283
    %v1335 = vunpack.c.h.b16 %v283
    %v1336 = vunpack.c.l.b16 %v284
    %v1337 = vunpack.c.h.b16 %v284
    %v1338 = vunpack.c.l.b16 %v285
    %v1339 = vunpack.c.h.b16 %v285
    %v1340 = vunpack.c.l.b16 %v286
    %v1341 = vunpack.c.h.b16 %v286
    %v1342 = vunpack.c.l.b16 %v287
    %v1343 = vunpack.c.h.b16 %v287
    %v1344 = vunpack.c.l.b16 %v288
    %v1345 = vunpack.c.h.b16 %v288
    %v1346 = vunpack.c.l.b16 %v289
    %v1347 = vunpack.c.h.b16 %v289
    %v1348 = vunpack.c.l.b16 %v290
    %v1349 = vunpack.c.h.b16 %v290
    %v1350 = vunpack.c.l.b16 %v291
    %v1351 = vunpack.c.h.b16 %v291
    %v1352 = vunpack.c.l.b16 %v292
    %v1353 = vunpack.c.h.b16 %v292
    %v1354 = vunpack.c.l.b16 %v293
    %v1355 = vunpack.c.h.b16 %v293
    %v1356 = vunpack.c.l.b16 %v294
    %v1357 = vunpack.c.h.b16 %v294
    %v1358 = vunpack.c.l.b16 %v295
    %v1359 = vunpack.c.h.b16 %v295
    %v1360 = vunpack.c.l.b16 %v296
    %v1361 = vunpack.c.h.b16 %v296
    %v1362 = vunpack.c.l.b16 %v297
    %v1363 = vunpack.c.h.b16 %v297
    %v1364 = vunpack.c.l.b16 %v298
    %v1365 = vunpack.c.h.b16 %v298
    %v1366 = vunpack.c.l.b16 %v299
    %v1367 = vunpack.c.h.b16 %v299
    %v1368 = vunpack.c.l.b16 %v300
    %v1369 = vunpack.c.h.b16 %v300
    %v1370 = vunpack.c.l.b16 %v301
    %v1371 = vunpack.c.h.b16 %v301
    %v1372 = vunpack.c.l.b16 %v302
    %v1373 = vunpack.c.h.b16 %v302
    %v1374 = vunpack.c.l.b16 %v303
    %v1375 = vunpack.c.h.b16 %v303
    %v1376 = vunpack.c.l.b16 %v304
    %v1377 = vunpack.c.h.b16 %v304
    %v1378 = vunpack.c.l.b16 %v305
    %v1379 = vunpack.c.h.b16 %v305
    %v1380 = vunpack.c.l.b16 %v306
    %v1381 = vunpack.c.h.b16 %v306
    %v1382 = vunpack.c.l.b16 %v307
    %v1383 = vunpack.c.h.b16 %v307
    %v1384 = vunpack.c.l.b16 %v308
    %v1385 = vunpack.c.h.b16 %v308
    %v1386 = vunpack.c.l.b16 %v309
    %v1387 = vunpack.c.h.b16 %v309
    %v1388 = vunpack.c.l.b16 %v310
    %v1389 = vunpack.c.h.b16 %v310
    %v1390 = vunpack.c.l.b16 %v311
    %v1391 = vunpack.c.h.b16 %v311
    %v1392 = vunpack.c.l.b16 %v312
    %v1393 = vunpack.c.h.b16 %v312
    %v1394 = vunpack.c.l.b16 %v313
    %v1395 = vunpack.c.h.b16 %v313
    %v1396 = vunpack.c.l.b16 %v314
    %v1397 = vunpack.c.h.b16 %v314
    %v1398 = vunpack.c.l.b16 %v315
    %v1399 = vunpack.c.h.b16 %v315
    %v1400 = vunpack.c.l.b16 %v316
    %v1401 = vunpack.c.h.b16 %v316
    %v1402 = vunpack.c.l.b16 %v317
    %v1403 = vunpack.c.h.b16 %v317
    %v1404 = vunpack.c.l.b16 %v318
    %v1405 = vunpack.c.h.b16 %v318
    %v1406 = vunpack.c.l.b16 %v319
    %v1407 = vunpack.c.h.b16 %v319
    %v1408 = vunpack.c.l.b16 %v320
    %v1409 = vunpack.c.h.b16 %v320
    %v1410 = vunpack.c.l.b16 %v321
    %v1411 = vunpack.c.h.b16 %v321
    %v1412 = vunpack.c.l.b16 %v322
    %v1413 = vunpack.c.h.b16 %v322
    %v1414 = vunpack.c.l.b16 %v323
    %v1415 = vunpack.c.h.b16 %v323
    %v1416 = vunpack.c.l.b16 %v324
    %v1417 = vunpack.c.h.b16 %v324
    %v1418 = vunpack.c.l.b16 %v325
    %v1419 = vunpack.c.h.b16 %v325
    %v1420 = vunpack.c.l.b16 %v326
    %v1421 = vunpack.c.h.b16 %v326
    %v1422 = vunpack.c.l.b16 %v327
    %v1423 = vunpack.c.h.b16 %v327
    %v1424 = vunpack.c.l.b16 %v328
    %v1425 = vunpack.c.h.b16 %v328
    %v1426 = vunpack.c.l.b16 %v329
    %v1427 = vunpack.c.h.b16 %v329
    %v1428 = vunpack.c.l.b16 %v330
    %v1429 = vunpack.c.h.b16 %v330
    %v1430 = vunpack.c.l.b16 %v331
    %v1431 = vunpack.c.h.b16 %v331
    %v1432 = vunpack.c.l.b16 %v332
    %v1433 = vunpack.c.h.b16 %v332
    %v1434 = vunpack.c.l.b16 %v333
    %v1435 = vunpack.c.h.b16 %v333
    %v1436 = vunpack.c.l.b16 %v334
    %v1437 = vunpack.c.h.b16 %v334
    %v1438 = vunpack.c.l.b16 %v335
    %v1439 = vunpack.c.h.b16 %v335
    %v1440 = vunpack.c.l.b16 %v336
    %v1441 = vunpack.c.h.b16 %v336
    %v1442 = vunpack.c.l.b16 %v337
    %v1443 = vunpack.c.h.b16 %v337
    %v1444 = vunpack.c.l.b16 %v338
    %v1445 = vunpack.c.h.b16 %v338
    %v1446 = vunpack.c.l.b16 %v339
    %v1447 = vunpack.c.h.b16 %v339
    %v1448 = vunpack.c.l.b16 %v340
    %v1449 = vunpack.c.h.b16 %v340
    %v1450 = vunpack.c.l.b16 %v341
    %v1451 = vunpack.c.h.b16 %v341
    %v1452 = vunpack.c.l.b16 %v342
    %v1453 = vunpack.c.h.b16 %v342
    %v1454 = vunpack.c.l.b16 %v343
    %v1455 = vunpack.c.h.b16 %v343
    %v1456 = vunpack.c.l.b16 %v344
    %v1457 = vunpack.c.h.b16 %v344
    %v1458 = vunpack.c.l.b16 %v345
    %v1459 = vunpack.c.h.b16 %v345
    %v1460 = vunpack.c.l.b16 %v346
    %v1461 = vunpack.c.h.b16 %v346
    %v1462 = vunpack.c.l.b16 %v347
    %v1463 = vunpack.c.h.b16 %v347
    %v1464 = vunpack.c.l.b16 %v348
    %v1465 = vunpack.c.h.b16 %v348
    %v1466 = vunpack.c.l.b16 %v349
    %v1467 = vunpack.c.h.b16 %v349
    %v1468 = vunpack.c.l.b16 %v350
    %v1469 = vunpack.c.h.b16 %v350
    %v1470 = vunpack.c.l.b16 %v351
    %v1471 = vunpack.c.h.b16 %v351
    %v1472 = vunpack.c.l.b16 %v352
    %v1473 = vunpack.c.h.b16 %v352
    %v1474 = vunpack.c.l.b16 %v353
    %v1475 = vunpack.c.h.b16 %v353
    %v1476 = vunpack.c.l.b16 %v354
    %v1477 = vunpack.c.h.b16 %v354
    %v1478 = vunpack.c.l.b16 %v355
    %v1479 = vunpack.c.h.b16 %v355
    %v1480 = vunpack.c.l.b16 %v356
    %v1481 = vunpack.c.h.b16 %v356
    %v1482 = vunpack.c.l.b16 %v357
    %v1483 = vunpack.c.h.b16 %v357
    %v1484 = vunpack.c.l.b16 %v358
    %v1485 = vunpack.c.h.b16 %v358
    %v1486 = vunpack.c.l.b16 %v359
    %v1487 = vunpack.c.h.b16 %v359
    %v1488 = vunpack.c.l.b16 %v360
    %v1489 = vunpack.c.h.b16 %v360
    %v1490 = vunpack.c.l.b16 %v361
    %v1491 = vunpack.c.h.b16 %v361
    %v1492 = vunpack.c.l.b16 %v362
    %v1493 = vunpack.c.h.b16 %v362
    %v1494 = vunpack.c.l.b16 %v363
    %v1495 = vunpack.c.h.b16 %v363
    %v1496 = vunpack.c.l.b16 %v364
    %v1497 = vunpack.c.h.b16 %v364
    %v1498 = vunpack.c.l.b16 %v365
    %v1499 = vunpack.c.h.b16 %v365
    %v1500 = vunpack.c.l.b16 %v366
    %v1501 = vunpack.c.h.b16 %v366
    %v1502 = vunpack.c.l.b16 %v367
    %v1503 = vunpack.c.h.b16 %v367
    %v1504 = vunpack.c.l.b16 %v368
    %v1505 = vunpack.c.h.b16 %v368
    %v1506 = vunpack.c.l.b16 %v369
    %v1507 = vunpack.c.h.b16 %v369
    %v1508 = vunpack.c.l.b16 %v370
    %v1509 = vunpack.c.h.b16 %v370
    %v1510 = vunpack.c.l.b16 %v371
    %v1511 = vunpack.c.h.b16 %v371
    %v1512 = vunpack.c.l.b16 %v372
    %v1513 = vunpack.c.h.b16 %v372
    %v1514 = vunpack.c.l.b16 %v373
    %v1515 = vunpack.c.h.b16 %v373
    %v1516 = vunpack.c.l.b16 %v374
    %v1517 = vunpack.c.h.b16 %v374
    %v1518 = vunpack.c.l.b16 %v375
    %v1519 = vunpack.c.h.b16 %v375
    %v1520 = vunpack.c.l.b16 %v376
    %v1521 = vunpack.c.h.b16 %v376
    %v1522 = vunpack.c.l.b16 %v377
    %v1523 = vunpack.c.h.b16 %v377
    %v1524 = vunpack.c.l.b16 %v378
    %v1525 = vunpack.c.h.b16 %v378
    %v1526 = vunpack.c.l.b16 %v379
    %v1527 = vunpack.c.h.b16 %v379
    %v1528 = vunpack.c.l.b16 %v380
    %v1529 = vunpack.c.h.b16 %v380
    %v1530 = vunpack.c.l.b16 %v381
    %v1531 = vunpack.c.h.b16 %v381
    %v1532 = vunpack.c.l.b16 %v382
    %v1533 = vunpack.c.h.b16 %v382
    %v1534 = vunpack.c.l.b16 %v383
    %v1535 = vunpack.c.h.b16 %v383
    %v1536 = vunpack.c.l.b16 %v384
    %v1537 = vunpack.c.h.b16 %v384
    %v1538 = vunpack.c.l.b16 %v385
    %v1539 = vunpack.c.h.b16 %v385
    %v1540 = vunpack.c.l.b16 %v386
    %v1541 = vunpack.c.h.b16 %v386
    %v1542 = vunpack.c.l.b16 %v387
    %v1543 = vunpack.c.h.b16 %v387
    %v1544 = vunpack.c.l.b16 %v388
    %v1545 = vunpack.c.h.b16 %v388
    %v1546 = vunpack.c.l.b16 %v389
    %v1547 = vunpack.c.h.b16 %v389
    %v1548 = vunpack.c.l.b16 %v390
    %v1549 = vunpack.c.h.b16 %v390
    %v1550 = vunpack.c.l.b16 %v391
    %v1551 = vunpack.c.h.b16 %v391
    %v1552 = vunpack.c.l.b16 %v392
    %v1553 = vunpack.c.h.b16 %v392
    %v1554 = vunpack.c.l.b16 %v393
    %v1555 = vunpack.c.h.b16 %v393
    %v1556 = vunpack.c.l.b16 %v394
    %v1557 = vunpack.c.h.b16 %v394
    %v1558 = vunpack.c.l.b16 %v395
    %v1559 = vunpack.c.h.b16 %v395
    %v1560 = vunpack.c.l.b16 %v396
    %v1561 = vunpack.c.h.b16 %v396
    %v1562 = vunpack.c.l.b16 %v397
    %v1563 = vunpack.c.h.b16 %v397
    %v1564 = vunpack.c.l.b16 %v398
    %v1565 = vunpack.c.h.b16 %v398
    %v1566 = vunpack.c.l.b16 %v399
    %v1567 = vunpack.c.h.b16 %v399
    %v1568 = vunpack.c.l.b16 %v400
    %v1569 = vunpack.c.h.b16 %v400
    %v1570 = vunpack.c.l.b16 %v401
    %v1571 = vunpack.c.h.b16 %v401
    %v1572 = vunpack.c.l.b16 %v402
    %v1573 = vunpack.c.h.b16 %v402
    %v1574 = vunpack.c.l.b16 %v403
    %v1575 = vunpack.c.h.b16 %v403
    %v1576 = vunpack.c.l.b16 %v404
    %v1577 = vunpack.c.h.b16 %v404
    %v1578 = vunpack.c.l.b16 %v405
    %v1579 = vunpack.c.h.b16 %v405
    %v1580 = vunpack.c.l.b16 %v406
    %v1581 = vunpack.c.h.b16 %v406
    %v1582 = vunpack.c.l.b16 %v407
    %v1583 = vunpack.c.h.b16 %v407
    %v1584 = vunpack.c.l.b16 %v408
    %v1585 = vunpack.c.h.b16 %v408
    %v1586 = vunpack.c.l.b16 %v409
    %v1587 = vunpack.c.h.b16 %v409
    %v1588 = vunpack.c.l.b16 %v410
    %v1589 = vunpack.c.h.b16 %v410
    %v1590 = vunpack.c.l.b16 %v411
    %v1591 = vunpack.c.h.b16 %v411
    %v1592 = vunpack.c.l.b16 %v412
    %v1593 = vunpack.c.h.b16 %v412
    %v1594 = vunpack.c.l.b16 %v413
    %v1595 = vunpack.c.h.b16 %v413
    %v1596 = vunpack.c.l.b16 %v414
    %v1597 = vunpack.c.h.b16 %v414
    %v1598 = vunpack.c.l.b16 %v415
    %v1599 = vunpack.c.h.b16 %v415
    %v1600 = vunpack.c.l.b16 %v416
    %v1601 = vunpack.c.h.b16 %v416
    %v1602 = vunpack.c.l.b16 %v417
    %v1603 = vunpack.c.h.b16 %v417
    %v1604 = vunpack.c.l.b16 %v418
    %v1605 = vunpack.c.h.b16 %v418
    %v1606 = vunpack.c.l.b16 %v419
    %v1607 = vunpack.c.h.b16 %v419
    %v1608 = vunpack.c.l.b16 %v420
    %v1609 = vunpack.c.h.b16 %v420
    %v1610 = vunpack.c.l.b16 %v421
    %v1611 = vunpack.c.h.b16 %v421
    %v1612 = vunpack.c.l.b16 %v422
    %v1613 = vunpack.c.h.b16 %v422
    %v1614 = vunpack.c.l.b16 %v423
    %v1615 = vunpack.c.h.b16 %v423
    %v1616 = vunpack.c.l.b16 %v424
    %v1617 = vunpack.c.h.b16 %v424
    %v1618 = vunpack.c.l.b16 %v425
    %v1619 = vunpack.c.h.b16 %v425
    %v1620 = vunpack.c.l.b16 %v426
    %v1621 = vunpack.c.h.b16 %v426
    %v1622 = vunpack.c.l.b16 %v427
    %v1623 = vunpack.c.h.b16 %v427
    %v1624 = vunpack.c.l.b16 %v428
    %v1625 = vunpack.c.h.b16 %v428
    %v1626 = vunpack.c.l.b16 %v429
    %v1627 = vunpack.c.h.b16 %v429
    %v1628 = vunpack.c.l.b16 %v430
    %v1629 = vunpack.c.h.b16 %v430
    %v1630 = vunpack.c.l.b16 %v431
    %v1631 = vunpack.c.h.b16 %v431
    %v1632 = vunpack.c.l.b16 %v432
    %v1633 = vunpack.c.h.b16 %v432
    %v1634 = vunpack.c.l.b16 %v433
    %v1635 = vunpack.c.h.b16 %v433
    %v1636 = vunpack.c.l.b16 %v434
    %v1637 = vunpack.c.h.b16 %v434
    %v1638 = vunpack.c.l.b16 %v435
    %v1639 = vunpack.c.h.b16 %v435
    %v1640 = vunpack.c.l.b16 %v436
    %v1641 = vunpack.c.h.b16 %v436
    %v1642 = vunpack.c.l.b16 %v437
    %v1643 = vunpack.c.h.b16 %v437
    %v1644 = vunpack.c.l.b16 %v438
    %v1645 = vunpack.c.h.b16 %v438
    %v1646 = vunpack.c.l.b16 %v439
    %v1647 = vunpack.c.h.b16 %v439
    %v1648 = vunpack.c.l.b16 %v440
    %v1649 = vunpack.c.h.b16 %v440
    %v1650 = vunpack.c.l.b16 %v441
    %v1651 = vunpack.c.h.b16 %v441
    %v1652 = vunpack.c.l.b16 %v442
    %v1653 = vunpack.c.h.b16 %v442
    %v1654 = vunpack.c.l.b16 %v443
    %v1655 = vunpack.c.h.b16 %v443
    %v1656 = vunpack.c.l.b16 %v444
    %v1657 = vunpack.c.h.b16 %v444
    %v1658 = vunpack.c.l.b16 %v445
    %v1659 = vunpack.c.h.b16 %v445
    %v1660 = vunpack.c.l.b16 %v446
    %v1661 = vunpack.c.h.b16 %v446
    %v1662 = vunpack.c.l.b16 %v447
    %v1663 = vunpack.c.h.b16 %v447
    %v1664 = vunpack.c.l.b16 %v448
    %v1665 = vunpack.c.h.b16 %v448
    %v1666 = vunpack.c.l.b16 %v449
    %v1667 = vunpack.c.h.b16 %v449
    %v1668 = vunpack.c.l.b16 %v450
    %v1669 = vunpack.c.h.b16 %v450
    %v1670 = vunpack.c.l.b16 %v451
    %v1671 = vunpack.c.h.b16 %v451
    %v1672 = vunpack.c.l.b16 %v452
    %v1673 = vunpack.c.h.b16 %v452
    %v1674 = vunpack.c.l.b16 %v453
    %v1675 = vunpack.c.h.b16 %v453
    %v1676 = vpack.c.b16 %v880, %v876
    %v1677 = vpack.c.b16 %v881, %v877
    %v1678 = vpack.c.b16 %v882, %v878
    %v1679 = vpack.c.b16 %v883, %v879
    %v1680 = vpack.c.b16 %v888, %v884
    %v1681 = vpack.c.b16 %v889, %v885
    %v1682 = vpack.c.b16 %v890, %v886
    %v1683 = vpack.c.b16 %v891, %v887
    %v1684 = vpack.c.b16 %v896, %v892
    %v1685 = vpack.c.b16 %v897, %v893
    %v1686 = vpack.c.b16 %v898, %v894
    %v1687 = vpack.c.b16 %v899, %v895
    %v1688 = vpack.c.b16 %v904, %v900
    %v1689 = vpack.c.b16 %v905, %v901
    %v1690 = vpack.c.b16 %v906, %v902
    %v1691 = vpack.c.b16 %v907, %v903
    %v1692 = vpack.c.b16 %v912, %v908
    %v1693 = vpack.c.b16 %v913, %v909
    %v1694 = vpack.c.b16 %v914, %v910
    %v1695 = vpack.c.b16 %v915, %v911
    %v1696 = vpack.c.b16 %v920, %v916
    %v1697 = vpack.c.b16 %v921, %v917
    %v1698 = vpack.c.b16 %v922, %v918
    %v1699 = vpack.c.b16 %v923, %v919
    %v1700 = vpack.c.b16 %v928, %v924
    %v1701 = vpack.c.b16 %v929, %v925
    %v1702 = vpack.c.b16 %v930, %v926
    %v1703 = vpack.c.b16 %v931, %v927
    %v1704 = vpack.c.b16 %v936, %v932
    %v1705 = vpack.c.b16 %v937, %v933
    %v1706 = vpack.c.b16 %v938, %v934
    %v1707 = vpack.c.b16 %v939, %v935
    %v1708 = vpack.c.b16 %v944, %v940
    %v1709 = vpack.c.b16 %v945, %v941
    %v1710 = vpack.c.b16 %v946, %v942
    %v1711 = vpack.c.b16 %v947, %v943
    %v1712 = vpack.c.b16 %v952, %v948
    %v1713 = vpack.c.b16 %v953, %v949
    %v1714 = vpack.c.b16 %v954, %v950
    %v1715 = vpack.c.b16 %v955, %v951
    %v1716 = vpack.c.b16 %v960, %v956
    %v1717 = vpack.c.b16 %v961, %v957
    %v1718 = vpack.c.b16 %v962, %v958
    %v1719 = vpack.c.b16 %v963, %v959
    %v1720 = vpack.c.b16 %v968, %v964
    %v1721 = vpack.c.b16 %v969, %v965
    %v1722 = vpack.c.b16 %v970, %v966
    %v1723 = vpack.c.b16 %v971, %v967
    %v1724 = vpack.c.b16 %v976, %v972
    %v1725 = vpack.c.b16 %v977, %v973
    %v1726 = vpack.c.b16 %v978, %v974
    %v1727 = vpack.c.b16 %v979, %v975
    %v1728 = vpack.c.b16 %v984, %v980
    %v1729 = vpack.c.b16 %v985, %v981
    %v1730 = vpack.c.b16 %v986, %v982
    %v1731 = vpack.c.b16 %v987, %v983
    %v1732 = vpack.c.b16 %v992, %v988
    %v1733 = vpack.c.b16 %v993, %v989
    %v1734 = vpack.c.b16 %v994, %v990
    %v1735 = vpack.c.b16 %v995, %v991
    %v1736 = vpack.c.b16 %v1000, %v996
    %v1737 = vpack.c.b16 %v1001, %v997
    %v1738 = vpack.c.b16 %v1002, %v998
    %v1739 = vpack.c.b16 %v1003, %v999
    %v1740 = vpack.c.b16 %v1008, %v1004
    %v1741 = vpack.c.b16 %v1009, %v1005
    %v1742 = vpack.c.b16 %v1010, %v1006
    %v1743 = vpack.c.b16 %v1011, %v1007
    %v1744 = vpack.c.b16 %v1016, %v1012
    %v1745 = vpack.c.b16 %v1017, %v1013
    %v1746 = vpack.c.b16 %v1018, %v1014
    %v1747 = vpack.c.b16 %v1019, %v1015
    %v1748 = vpack.c.b16 %v1024, %v1020
    %v1749 = vpack.c.b16 %v1025, %v1021
    %v1750 = vpack.c.b16 %v1026, %v1022
    %v1751 = vpack.c.b16 %v1027, %v1023
    %v1752 = vpack.c.b16 %v1032, %v1028
    %v1753 = vpack.c.b16 %v1033, %v1029
    %v1754 = vpack.c.b16 %v1034, %v1030
    %v1755 = vpack.c.b16 %v1035, %v1031
    %v1756 = vpack.c.b16 %v1040, %v1036
    %v1757 = vpack.c.b16 %v1041, %v1037
    %v1758 = vpack.c.b16 %v1042, %v1038
    %v1759 = vpack.c.b16 %v1043, %v1039
    %v1760 = vpack.c.b16 %v1048, %v1044
    %v1761 = vpack.c.b16 %v1049, %v1045
    %v1762 = vpack.c.b16 %v1050, %v1046
    %v1763 = vpack.c.b16 %v1051, %v1047
    %v1764 = vpack.c.b16 %v1056, %v1052
    %v1765 = vpack.c.b16 %v1057, %v1053
    %v1766 = vpack.c.b16 %v1058, %v1054
    %v1767 = vpack.c.b16 %v1059, %v1055
    %v1768 = vpack.c.b16 %v1064, %v1060
    %v1769 = vpack.c.b16 %v1065, %v1061
    %v1770 = vpack.c.b16 %v1066, %v1062
    %v1771 = vpack.c.b16 %v1067, %v1063
    %v1772 = vpack.c.b16 %v1072, %v1068
    %v1773 = vpack.c.b16 %v1073, %v1069
    %v1774 = vpack.c.b16 %v1074, %v1070
    %v1775 = vpack.c.b16 %v1075, %v1071
    %v1776 = vpack.c.b16 %v1080, %v1076
    %v1777 = vpack.c.b16 %v1081, %v1077
    %v1778 = vpack.c.b16 %v1082, %v1078
    %v1779 = vpack.c.b16 %v1083, %v1079
    %v1780 = vpack.c.b16 %v1088, %v1084
    %v1781 = vpack.c.b16 %v1089, %v1085
    %v1782 = vpack.c.b16 %v1090, %v1086
    %v1783 = vpack.c.b16 %v1091, %v1087
    %v1784 = vpack.c.b16 %v1096, %v1092
    %v1785 = vpack.c.b16 %v1097, %v1093
    %v1786 = vpack.c.b16 %v1098, %v1094
    %v1787 = vpack.c.b16 %v1099, %v1095
    %v1788 = vpack.c.b16 %v1104, %v1100
    %v1789 = vpack.c.b16 %v1105, %v1101
    %v1790 = vpack.c.b16 %v1106, %v1102
    %v1791 = vpack.c.b16 %v1107, %v1103
    %v1792 = vpack.c.b16 %v1112, %v1108
    %v1793 = vpack.c.b16 %v1113, %v1109
    %v1794 = vpack.c.b16 %v1114, %v1110
    %v1795 = vpack.c.b16 %v1115, %v1111
    %v1796 = vpack.c.b16 %v1120, %v1116
    %v1797 = vpack.c.b16 %v1121, %v1117
    %v1798 = vpack.c.b16 %v1122, %v1118
    %v1799 = vpack.c.b16 %v1123, %v1119
    %v1800 = vpack.c.b16 %v1128, %v1124
    %v1801 = vpack.c.b16 %v1129, %v1125
    %v1802 = vpack.c.b16 %v1130, %v1126
    %v1803 = vpack.c.b16 %v1131, %v1127
    %v1804 = vpack.c.b16 %v1136, %v1132
    %v1805 = vpack.c.b16 %v1137, %v1133
    %v1806 = vpack.c.b16 %v1138, %v1134
    %v1807 = vpack.c.b16 %v1139, %v1135
    %v1808 = vpack.c.b16 %v1144, %v1140
    %v1809 = vpack.c.b16 %v1145, %v1141
    %v1810 = vpack.c.b16 %v1146, %v1142
    %v1811 = vpack.c.b16 %v1147, %v1143
    %v1812 = vpack.c.b16 %v1152, %v1148
    %v1813 = vpack.c.b16 %v1153, %v1149
    %v1814 = vpack.c.b16 %v1154, %v1150
    %v1815 = vpack.c.b16 %v1155, %v1151
    %v1816 = vpack.c.b16 %v1160, %v1156
    %v1817 = vpack.c.b16 %v1161, %v1157
    %v1818 = vpack.c.b16 %v1162, %v1158
    %v1819 = vpack.c.b16 %v1163, %v1159
    %v1820 = vpack.c.b16 %v1168, %v1164
    %v1821 = vpack.c.b16 %v1169, %v1165
    %v1822 = vpack.c.b16 %v1170, %v1166
    %v1823 = vpack.c.b16 %v1171, %v1167
    %v1824 = vpack.c.b16 %v1176, %v1172
    %v1825 = vpack.c.b16 %v1177, %v1173
    %v1826 = vpack.c.b16 %v1178, %v1174
    %v1827 = vpack.c.b16 %v1179, %v1175
    %v1828 = vpack.c.b16 %v1184, %v1180
    %v1829 = vpack.c.b16 %v1185, %v1181
    %v1830 = vpack.c.b16 %v1186, %v1182
    %v1831 = vpack.c.b16 %v1187, %v1183
    %v1832 = vpack.c.b16 %v1192, %v1188
    %v1833 = vpack.c.b16 %v1193, %v1189
    %v1834 = vpack.c.b16 %v1194, %v1190
    %v1835 = vpack.c.b16 %v1195, %v1191
    %v1836 = vpack.c.b16 %v1200, %v1196
    %v1837 = vpack.c.b16 %v1201, %v1197
    %v1838 = vpack.c.b16 %v1202, %v1198
    %v1839 = vpack.c.b16 %v1203, %v1199
    %v1840 = vpack.c.b16 %v1208, %v1204
    %v1841 = vpack.c.b16 %v1209, %v1205
    %v1842 = vpack.c.b16 %v1210, %v1206
    %v1843 = vpack.c.b16 %v1211, %v1207
    %v1844 = vpack.c.b16 %v1216, %v1212
    %v1845 = vpack.c.b16 %v1217, %v1213
    %v1846 = vpack.c.b16 %v1218, %v1214
    %v1847 = vpack.c.b16 %v1219, %v1215
    %v1848 = vpack.c.b16 %v1224, %v1220
    %v1849 = vpack.c.b16 %v1225, %v1221
    %v1850 = vpack.c.b16 %v1226, %v1222
    %v1851 = vpack.c.b16 %v1227, %v1223
    %v1852 = vpack.c.b16 %v1232, %v1228
    %v1853 = vpack.c.b16 %v1233, %v1229
    %v1854 = vpack.c.b16 %v1234, %v1230
    %v1855 = vpack.c.b16 %v1235, %v1231
    %v1856 = vpack.c.b16 %v1240, %v1236
    %v1857 = vpack.c.b16 %v1241, %v1237
    %v1858 = vpack.c.b16 %v1242, %v1238
    %v1859 = vpack.c.b16 %v1243, %v1239
    %v1860 = vpack.c.b16 %v1248, %v1244
    %v1861 = vpack.c.b16 %v1249, %v1245
    %v1862 = vpack.c.b16 %v1250, %v1246
    %v1863 = vpack.c.b16 %v1251, %v1247
    %v1864 = vpack.c.b16 %v1256, %v1252
    %v1865 = vpack.c.b16 %v1257, %v1253
    %v1866 = vpack.c.b16 %v1258, %v1254
    %v1867 = vpack.c.b16 %v1259, %v1255
    %v1868 = vpack.c.b16 %v1264, %v1260
    %v1869 = vpack.c.b16 %v1265, %v1261
    %v1870 = vpack.c.b16 %v1266, %v1262
    %v1871 = vpack.c.b16 %v1267, %v1263
    %v1872 = vpack.c.b16 %v1272, %v1268
    %v1873 = vpack.c.b16 %v1273, %v1269
    %v1874 = vpack.c.b16 %v1274, %v1270
    %v1875 = vpack.c.b16 %v1275, %v1271
    %v1876 = vpack.c.b16 %v1280, %v1276
    %v1877 = vpack.c.b16 %v1281, %v1277
    %v1878 = vpack.c.b16 %v1282, %v1278
    %v1879 = vpack.c.b16 %v1283, %v1279
    %v1880 = vpack.c.b16 %v1288, %v1284
    %v1881 = vpack.c.b16 %v1289, %v1285
    %v1882 = vpack.c.b16 %v1290, %v1286
    %v1883 = vpack.c.b16 %v1291, %v1287
    %v1884 = vpack.c.b16 %v1296, %v1292
    %v1885 = vpack.c.b16 %v1297, %v1293
    %v1886 = vpack.c.b16 %v1298, %v1294
    %v1887 = vpack.c.b16 %v1299, %v1295
    %v1888 = vpack.c.b16 %v1304, %v1300
    %v1889 = vpack.c.b16 %v1305, %v1301
    %v1890 = vpack.c.b16 %v1306, %v1302
    %v1891 = vpack.c.b16 %v1307, %v1303
    %v1892 = vpack.c.b16 %v1312, %v1308
    %v1893 = vpack.c.b16 %v1313, %v1309
    %v1894 = vpack.c.b16 %v1314, %v1310
    %v1895 = vpack.c.b16 %v1315, %v1311
    %v1896 = vpack.c.b16 %v1320, %v1316
    %v1897 = vpack.c.b16 %v1321, %v1317
    %v1898 = vpack.c.b16 %v1322, %v1318
    %v1899 = vpack.c.b16 %v1323, %v1319
    %v1900 = vpack.c.b16 %v1328, %v1324
    %v1901 = vpack.c.b16 %v1329, %v1325
    %v1902 = vpack.c.b16 %v1330, %v1326
    %v1903 = vpack.c.b16 %v1331, %v1327
    %v1904 = vpack.c.b16 %v1336, %v1332
    %v1905 = vpack.c.b16 %v1337, %v1333
    %v1906 = vpack.c.b16 %v1338, %v1334
    %v1907 = vpack.c.b16 %v1339, %v1335
    %v1908 = vpack.c.b16 %v1344, %v1340
    %v1909 = vpack.c.b16 %v1345, %v1341
    %v1910 = vpack.c.b16 %v1346, %v1342
    %v1911 = vpack.c.b16 %v1347, %v1343
    %v1912 = vpack.c.b16 %v1352, %v1348
    %v1913 = vpack.c.b16 %v1353, %v1349
    %v1914 = vpack.c.b16 %v1354, %v1350
    %v1915 = vpack.c.b16 %v1355, %v1351
    %v1916 = vpack.c.b16 %v1360, %v1356
    %v1917 = vpack.c.b16 %v1361, %v1357
    %v1918 = vpack.c.b16 %v1362, %v1358
    %v1919 = vpack.c.b16 %v1363, %v1359
    %v1920 = vpack.c.b16 %v1368, %v1364
    %v1921 = vpack.c.b16 %v1369, %v1365
    %v1922 = vpack.c.b16 %v1370, %v1366
    %v1923 = vpack.c.b16 %v1371, %v1367
    %v1924 = vpack.c.b16 %v1376, %v1372
    %v1925 = vpack.c.b16 %v1377, %v1373
    %v1926 = vpack.c.b16 %v1378, %v1374
    %v1927 = vpack.c.b16 %v1379, %v1375
    %v1928 = vpack.c.b16 %v1384, %v1380
    %v1929 = vpack.c.b16 %v1385, %v1381
    %v1930 = vpack.c.b16 %v1386, %v1382
    %v1931 = vpack.c.b16 %v1387, %v1383
    %v1932 = vpack.c.b16 %v1392, %v1388
    %v1933 = vpack.c.b16 %v1393, %v1389
    %v1934 = vpack.c.b16 %v1394, %v1390
    %v1935 = vpack.c.b16 %v1395, %v1391
    %v1936 = vpack.c.b16 %v1400, %v1396
    %v1937 = vpack.c.b16 %v1401, %v1397
    %v1938 = vpack.c.b16 %v1402, %v1398
    %v1939 = vpack.c.b16 %v1403, %v1399
    %v1940 = vpack.c.b16 %v1408, %v1404
    %v1941 = vpack.c.b16 %v1409, %v1405
    %v1942 = vpack.c.b16 %v1410, %v1406
    %v1943 = vpack.c.b16 %v1411, %v1407
    %v1944 = vpack.c.b16 %v1416, %v1412
    %v1945 = vpack.c.b16 %v1417, %v1413
    %v1946 = vpack.c.b16 %v1418, %v1414
    %v1947 = vpack.c.b16 %v1419, %v1415
    %v1948 = vpack.c.b16 %v1424, %v1420
    %v1949 = vpack.c.b16 %v1425, %v1421
    %v1950 = vpack.c.b16 %v1426, %v1422
    %v1951 = vpack.c.b16 %v1427, %v1423
    %v1952 = vpack.c.b16 %v1432, %v1428
    %v1953 = vpack.c.b16 %v1433, %v1429
    %v1954 = vpack.c.b16 %v1434, %v1430
    %v1955 = vpack.c.b16 %v1435, %v1431
    %v1956 = vpack.c.b16 %v1440, %v1436
    %v1957 = vpack.c.b16 %v1441, %v1437
    %v1958 = vpack.c.b16 %v1442, %v1438
    %v1959 = vpack.c.b16 %v1443, %v1439
    %v1960 = vpack.c.b16 %v1448, %v1444
    %v1961 = vpack.c.b16 %v1449, %v1445
    %v1962 = vpack.c.b16 %v1450, %v1446
    %v1963 = vpack.c.b16 %v1451, %v1447
    %v1964 = vpack.c.b16 %v1456, %v1452
    %v1965 = vpack.c.b16 %v1457, %v1453
    %v1966 = vpack.c.b16 %v1458, %v1454
    %v1967 = vpack.c.b16 %v1459, %v1455
    %v1968 = vpack.c.b16 %v1464, %v1460
    %v1969 = vpack.c.b16 %v1465, %v1461
    %v1970 = vpack.c.b16 %v1466, %v1462
    %v1971 = vpack.c.b16 %v1467, %v1463
    %v1972 = vpack.c.b16 %v1472, %v1468
    %v1973 = vpack.c.b16 %v1473, %v1469
    %v1974 = vpack.c.b16 %v1474, %v1470
    %v1975 = vpack.c.b16 %v1475, %v1471
    %v1976 = vpack.c.b16 %v1480, %v1476
    %v1977 = vpack.c.b16 %v1481, %v1477
    %v1978 = vpack.c.b16 %v1482, %v1478
    %v1979 = vpack.c.b16 %v1483, %v1479
    %v1980 = vpack.c.b16 %v1488, %v1484
    %v1981 = vpack.c.b16 %v1489, %v1485
    %v1982 = vpack.c.b16 %v1490, %v1486
    %v1983 = vpack.c.b16 %v1491, %v1487
    %v1984 = vpack.c.b16 %v1496, %v1492
    %v1985 = vpack.c.b16 %v1497, %v1493
    %v1986 = vpack.c.b16 %v1498, %v1494
    %v1987 = vpack.c.b16 %v1499, %v1495
    %v1988 = vpack.c.b16 %v1504, %v1500
    %v1989 = vpack.c.b16 %v1505, %v1501
    %v1990 = vpack.c.b16 %v1506, %v1502
    %v1991 = vpack.c.b16 %v1507, %v1503
    %v1992 = vpack.c.b16 %v1512, %v1508
    %v1993 = vpack.c.b16 %v1513, %v1509
    %v1994 = vpack.c.b16 %v1514, %v1510
    %v1995 = vpack.c.b16 %v1515, %v1511
    %v1996 = vpack.c.b16 %v1520, %v1516
    %v1997 = vpack.c.b16 %v1521, %v1517
    %v1998 = vpack.c.b16 %v1522, %v1518
    %v1999 = vpack.c.b16 %v1523, %v1519
    %v2000 = vpack.c.b16 %v1528, %v1524
    %v2001 = vpack.c.b16 %v1529, %v1525
    %v2002 = vpack.c.b16 %v1530, %v1526
    %v2003 = vpack.c.b16 %v1531, %v1527
    %v2004 = vpack.c.b16 %v1536, %v1532
    %v2005 = vpack.c.b16 %v1537, %v1533
    %v2006 = vpack.c.b16 %v1538, %v1534
    %v2007 = vpack.c.b16 %v1539, %v1535
    %v2008 = vpack.c.b16 %v1544, %v1540
    %v2009 = vpack.c.b16 %v1545, %v1541
    %v2010 = vpack.c.b16 %v1546, %v1542
    %v2011 = vpack.c.b16 %v1547, %v1543
    %v2012 = vpack.c.b16 %v1552, %v1548
    %v2013 = vpack.c.b16 %v1553, %v1549
    %v2014 = vpack.c.b16 %v1554, %v1550
    %v2015 = vpack.c.b16 %v1555, %v1551
    %v2016 = vpack.c.b16 %v1560, %v1556
    %v2017 = vpack.c.b16 %v1561, %v1557
    %v2018 = vpack.c.b16 %v1562, %v1558
    %v2019 = vpack.c.b16 %v1563, %v1559
    %v2020 = vpack.c.b16 %v1568, %v1564
    %v2021 = vpack.c.b16 %v1569, %v1565
    %v2022 = vpack.c.b16 %v1570, %v1566
    %v2023 = vpack.c.b16 %v1571, %v1567
    %v2024 = vpack.c.b16 %v1576, %v1572
    %v2025 = vpack.c.b16 %v1577, %v1573
    %v2026 = vpack.c.b16 %v1578, %v1574
    %v2027 = vpack.c.b16 %v1579, %v1575
    %v2028 = vpack.c.b16 %v1584, %v1580
    %v2029 = vpack.c.b16 %v1585, %v1581
    %v2030 = vpack.c.b16 %v1586, %v1582
    %v2031 = vpack.c.b16 %v1587, %v1583
    %v2032 = vpack.c.b16 %v1592, %v1588
    %v2033 = vpack.c.b16 %v1593, %v1589
    %v2034 = vpack.c.b16 %v1594, %v1590
    %v2035 = vpack.c.b16 %v1595, %v1591
    %v2036 = vpack.c.b16 %v1600, %v1596
    %v2037 = vpack.c.b16 %v1601, %v1597
    %v2038 = vpack.c.b16 %v1602, %v1598
    %v2039 = vpack.c.b16 %v1603, %v1599
    %v2040 = vpack.c.b16 %v1608, %v1604
    %v2041 = vpack.c.b16 %v1609, %v1605
    %v2042 = vpack.c.b16 %v1610, %v1606
    %v2043 = vpack.c.b16 %v1611, %v1607
    %v2044 = vpack.c.b16 %v1616, %v1612
    %v2045 = vpack.c.b16 %v1617, %v1613
    %v2046 = vpack.c.b16 %v1618, %v1614
    %v2047 = vpack.c.b16 %v1619, %v1615
    %v2048 = vpack.c.b16 %v1624, %v1620
    %v2049 = vpack.c.b16 %v1625, %v1621
    %v2050 = vpack.c.b16 %v1626, %v1622
    %v2051 = vpack.c.b16 %v1627, %v1623
    %v2052 = vpack.c.b16 %v1632, %v1628
    %v2053 = vpack.c.b16 %v1633, %v1629
    %v2054 = vpack.c.b16 %v1634, %v1630
    %v2055 = vpack.c.b16 %v1635, %v1631
    %v2056 = vpack.c.b16 %v1640, %v1636
    %v2057 = vpack.c.b16 %v1641, %v1637
    %v2058 = vpack.c.b16 %v1642, %v1638
    %v2059 = vpack.c.b16 %v1643, %v1639
    %v2060 = vpack.c.b16 %v1648, %v1644
    %v2061 = vpack.c.b16 %v1649, %v1645
    %v2062 = vpack.c.b16 %v1650, %v1646
    %v2063 = vpack.c.b16 %v1651, %v1647
    %v2064 = vpack.c.b16 %v1656, %v1652
    %v2065 = vpack.c.b16 %v1657, %v1653
    %v2066 = vpack.c.b16 %v1658, %v1654
    %v2067 = vpack.c.b16 %v1659, %v1655
    %v2068 = vpack.c.b16 %v1664, %v1660
    %v2069 = vpack.c.b16 %v1665, %v1661
    %v2070 = vpack.c.b16 %v1666, %v1662
    %v2071 = vpack.c.b16 %v1667, %v1663
    %v2072 = vpack.c.b16 %v1672, %v1668
    %v2073 = vpack.c.b16 %v1673, %v1669
    %v2074 = vpack.c.b16 %v1674, %v1670
    %v2075 = vpack.c.b16 %v1675, %v1671
    %vm2476 = vcmask 523264
    %v2478 = vsel %vm2476, %v53, 0
    %2480 = vmatprep.subr.bf16.mxu0 %v1705
    %2481 = vmatpush1.bf16.msra.mxu0 %v1704
    %2482 = vmatprep.subr.bf16.mxu0 %v1701
    %2483 = vmatpush1.bf16.msra.mxu0 %v1700
    %2484 = vmatprep.subr.bf16.mxu0 %v1697
    %2485 = vmatpush1.bf16.msra.mxu0 %v1696
    %2486 = vmatprep.subr.bf16.mxu0 %v1693
    %2487 = vmatpush1.bf16.msra.mxu0 %v1692
    %2488 = vmatprep.subr.bf16.mxu0 %v1689
    %2489 = vmatpush1.bf16.msra.mxu0 %v1688
    %2490 = vmatprep.subr.bf16.mxu0 %v1685
    %2491 = vmatpush1.bf16.msra.mxu0 %v1684
    %2492 = vmatprep.subr.bf16.mxu0 %v1681
    %2493 = vmatpush1.bf16.msra.mxu0 %v1680
    %2494 = vmatprep.subr.bf16.mxu0 %v1677
    %2495 = vmatpush1.bf16.msra.mxu0 %v1676
    %2496 = vmatprep.subr.bf16.mxu0 %v1737
    %2497 = vmatpush2.bf16.msra.mxu0 %v1736
    %2498 = vmatprep.subr.bf16.mxu0 %v1733
    %2499 = vmatpush2.bf16.msra.mxu0 %v1732
    %2500 = vmatprep.subr.bf16.mxu0 %v1729
    %2501 = vmatpush2.bf16.msra.mxu0 %v1728
    %2502 = vmatprep.subr.bf16.mxu0 %v1725
    %2503 = vmatpush2.bf16.msra.mxu0 %v1724
    %2504 = vmatprep.subr.bf16.mxu0 %v1721
    %2505 = vmatpush2.bf16.msra.mxu0 %v1720
    %2506 = vmatprep.subr.bf16.mxu0 %v1717
    %2507 = vmatpush2.bf16.msra.mxu0 %v1716
    %2508 = vmatprep.subr.bf16.mxu0 %v1713
    %2509 = vmatpush2.bf16.msra.mxu0 %v1712
    %2510 = vmatprep.subr.bf16.mxu0 %v1709
    %2511 = vmatpush2.bf16.msra.mxu0 %v1708
    %2512 = vmatprep.mubr.bf16.mxu0 %v42
    %2513 = vmatmul.mubr.bf16.gmra.mxu0 %v41
    %v2514 = vpop.f32.mrf.mxu0
    %v2515 = vadd.f32 %v459, %v2514
    %v2516 = vpop.f32.mrf.mxu0
    %v2517 = vadd.f32 %v463, %v2516
    %v2518 = vpop.f32.mrf.mxu0
    %v2519 = vpop.f32.mrf.mxu0
    %2520 = vdwg.mxu0
    %2521 = vmatprep.subr.bf16.mxu0 %v1769
    %2522 = vmatpush1.bf16.msra.mxu0 %v1768
    %2523 = vmatprep.subr.bf16.mxu0 %v1765
    %2524 = vmatpush1.bf16.msra.mxu0 %v1764
    %2525 = vmatprep.subr.bf16.mxu0 %v1761
    %2526 = vmatpush1.bf16.msra.mxu0 %v1760
    %2527 = vmatprep.subr.bf16.mxu0 %v1757
    %2528 = vmatpush1.bf16.msra.mxu0 %v1756
    %2529 = vmatprep.subr.bf16.mxu0 %v1753
    %2530 = vmatpush1.bf16.msra.mxu0 %v1752
    %2531 = vmatprep.subr.bf16.mxu0 %v1749
    %2532 = vmatpush1.bf16.msra.mxu0 %v1748
    %2533 = vmatprep.subr.bf16.mxu0 %v1745
    %2534 = vmatpush1.bf16.msra.mxu0 %v1744
    %2535 = vmatprep.subr.bf16.mxu0 %v1741
    %2536 = vmatpush1.bf16.msra.mxu0 %v1740
    %2537 = vmatprep.subr.bf16.mxu0 %v1801
    %2538 = vmatpush2.bf16.msra.mxu0 %v1800
    %2539 = vmatprep.subr.bf16.mxu0 %v1797
    %2540 = vmatpush2.bf16.msra.mxu0 %v1796
    %2541 = vmatprep.subr.bf16.mxu0 %v1793
    %2542 = vmatpush2.bf16.msra.mxu0 %v1792
    %2543 = vmatprep.subr.bf16.mxu0 %v1789
    %2544 = vmatpush2.bf16.msra.mxu0 %v1788
    %2545 = vmatprep.subr.bf16.mxu0 %v1785
    %2546 = vmatpush2.bf16.msra.mxu0 %v1784
    %2547 = vmatprep.subr.bf16.mxu0 %v1781
    %2548 = vmatpush2.bf16.msra.mxu0 %v1780
    %2549 = vmatprep.subr.bf16.mxu0 %v1777
    %2550 = vmatpush2.bf16.msra.mxu0 %v1776
    %2551 = vmatprep.subr.bf16.mxu0 %v1773
    %2552 = vmatpush2.bf16.msra.mxu0 %v1772
    %2553 = vmatprep.mubr.bf16.mxu0 %v44
    %2554 = vmatmul.mubr.bf16.gmra.mxu0 %v43
    %v2555 = vpop.f32.mrf.mxu0
    %v2556 = vadd.f32 %v2515, %v2555
    %v2557 = vpop.f32.mrf.mxu0
    %v2558 = vadd.f32 %v2517, %v2557
    %v2559 = vpop.f32.mrf.mxu0
    %v2560 = vpop.f32.mrf.mxu0
    %2561 = vdwg.mxu0
    %2562 = vmatprep.subr.bf16.mxu0 %v1833
    %2563 = vmatpush1.bf16.msra.mxu0 %v1832
    %2564 = vmatprep.subr.bf16.mxu0 %v1829
    %2565 = vmatpush1.bf16.msra.mxu0 %v1828
    %2566 = vmatprep.subr.bf16.mxu0 %v1825
    %2567 = vmatpush1.bf16.msra.mxu0 %v1824
    %2568 = vmatprep.subr.bf16.mxu0 %v1821
    %2569 = vmatpush1.bf16.msra.mxu0 %v1820
    %2570 = vmatprep.subr.bf16.mxu0 %v1817
    %2571 = vmatpush1.bf16.msra.mxu0 %v1816
    %2572 = vmatprep.subr.bf16.mxu0 %v1813
    %2573 = vmatpush1.bf16.msra.mxu0 %v1812
    %2574 = vmatprep.subr.bf16.mxu0 %v1809
    %2575 = vmatpush1.bf16.msra.mxu0 %v1808
    %2576 = vmatprep.subr.bf16.mxu0 %v1805
    %2577 = vmatpush1.bf16.msra.mxu0 %v1804
    %2578 = vmatprep.subr.bf16.mxu0 %v1865
    %2579 = vmatpush2.bf16.msra.mxu0 %v1864
    %2580 = vmatprep.subr.bf16.mxu0 %v1861
    %2581 = vmatpush2.bf16.msra.mxu0 %v1860
    %2582 = vmatprep.subr.bf16.mxu0 %v1857
    %2583 = vmatpush2.bf16.msra.mxu0 %v1856
    %2584 = vmatprep.subr.bf16.mxu0 %v1853
    %2585 = vmatpush2.bf16.msra.mxu0 %v1852
    %2586 = vmatprep.subr.bf16.mxu0 %v1849
    %2587 = vmatpush2.bf16.msra.mxu0 %v1848
    %2588 = vmatprep.subr.bf16.mxu0 %v1845
    %2589 = vmatpush2.bf16.msra.mxu0 %v1844
    %2590 = vmatprep.subr.bf16.mxu0 %v1841
    %2591 = vmatpush2.bf16.msra.mxu0 %v1840
    %2592 = vmatprep.subr.bf16.mxu0 %v1837
    %2593 = vmatpush2.bf16.msra.mxu0 %v1836
    %2594 = vmatprep.mubr.bf16.mxu0 %v46
    %2595 = vmatmul.mubr.bf16.gmra.mxu0 %v45
    %v2596 = vpop.f32.mrf.mxu0
    %v2597 = vadd.f32 %v2556, %v2596
    %v2598 = vpop.f32.mrf.mxu0
    %v2599 = vadd.f32 %v2558, %v2598
    %v2600 = vpop.f32.mrf.mxu0
    %v2601 = vpop.f32.mrf.mxu0
    %2602 = vdwg.mxu0
    %2603 = vmatprep.subr.bf16.mxu0 %v1897
    %2604 = vmatpush1.bf16.msra.mxu0 %v1896
    %2605 = vmatprep.subr.bf16.mxu0 %v1893
    %2606 = vmatpush1.bf16.msra.mxu0 %v1892
    %2607 = vmatprep.subr.bf16.mxu0 %v1889
    %2608 = vmatpush1.bf16.msra.mxu0 %v1888
    %2609 = vmatprep.subr.bf16.mxu0 %v1885
    %2610 = vmatpush1.bf16.msra.mxu0 %v1884
    %2611 = vmatprep.subr.bf16.mxu0 %v1881
    %2612 = vmatpush1.bf16.msra.mxu0 %v1880
    %2613 = vmatprep.subr.bf16.mxu0 %v1877
    %2614 = vmatpush1.bf16.msra.mxu0 %v1876
    %2615 = vmatprep.subr.bf16.mxu0 %v1873
    %2616 = vmatpush1.bf16.msra.mxu0 %v1872
    %2617 = vmatprep.subr.bf16.mxu0 %v1869
    %2618 = vmatpush1.bf16.msra.mxu0 %v1868
    %2619 = vmatprep.subr.bf16.mxu0 %v1929
    %2620 = vmatpush2.bf16.msra.mxu0 %v1928
    %2621 = vmatprep.subr.bf16.mxu0 %v1925
    %2622 = vmatpush2.bf16.msra.mxu0 %v1924
    %2623 = vmatprep.subr.bf16.mxu0 %v1921
    %2624 = vmatpush2.bf16.msra.mxu0 %v1920
    %2625 = vmatprep.subr.bf16.mxu0 %v1917
    %2626 = vmatpush2.bf16.msra.mxu0 %v1916
    %2627 = vmatprep.subr.bf16.mxu0 %v1913
    %2628 = vmatpush2.bf16.msra.mxu0 %v1912
    %2629 = vmatprep.subr.bf16.mxu0 %v1909
    %2630 = vmatpush2.bf16.msra.mxu0 %v1908
    %2631 = vmatprep.subr.bf16.mxu0 %v1905
    %2632 = vmatpush2.bf16.msra.mxu0 %v1904
    %2633 = vmatprep.subr.bf16.mxu0 %v1901
    %2634 = vmatpush2.bf16.msra.mxu0 %v1900
    %2635 = vmatprep.mubr.bf16.mxu0 %v48
    %2636 = vmatmul.mubr.bf16.gmra.mxu0 %v47
    %v2637 = vpop.f32.mrf.mxu0
    %v2638 = vadd.f32 %v2597, %v2637
    %v2639 = vpop.f32.mrf.mxu0
    %v2640 = vadd.f32 %v2599, %v2639
    %v2641 = vpop.f32.mrf.mxu0
    %v2642 = vpop.f32.mrf.mxu0
    %2643 = vdwg.mxu0
    %2644 = vmatprep.subr.bf16.mxu0 %v1961
    %2645 = vmatpush1.bf16.msra.mxu0 %v1960
    %2646 = vmatprep.subr.bf16.mxu0 %v1957
    %2647 = vmatpush1.bf16.msra.mxu0 %v1956
    %2648 = vmatprep.subr.bf16.mxu0 %v1953
    %2649 = vmatpush1.bf16.msra.mxu0 %v1952
    %2650 = vmatprep.subr.bf16.mxu0 %v1949
    %2651 = vmatpush1.bf16.msra.mxu0 %v1948
    %2652 = vmatprep.subr.bf16.mxu0 %v1945
    %2653 = vmatpush1.bf16.msra.mxu0 %v1944
    %2654 = vmatprep.subr.bf16.mxu0 %v1941
    %2655 = vmatpush1.bf16.msra.mxu0 %v1940
    %2656 = vmatprep.subr.bf16.mxu0 %v1937
    %2657 = vmatpush1.bf16.msra.mxu0 %v1936
    %2658 = vmatprep.subr.bf16.mxu0 %v1933
    %2659 = vmatpush1.bf16.msra.mxu0 %v1932
    %2660 = vmatprep.subr.bf16.mxu0 %v1993
    %2661 = vmatpush2.bf16.msra.mxu0 %v1992
    %2662 = vmatprep.subr.bf16.mxu0 %v1989
    %2663 = vmatpush2.bf16.msra.mxu0 %v1988
    %2664 = vmatprep.subr.bf16.mxu0 %v1985
    %2665 = vmatpush2.bf16.msra.mxu0 %v1984
    %2666 = vmatprep.subr.bf16.mxu0 %v1981
    %2667 = vmatpush2.bf16.msra.mxu0 %v1980
    %2668 = vmatprep.subr.bf16.mxu0 %v1977
    %2669 = vmatpush2.bf16.msra.mxu0 %v1976
    %2670 = vmatprep.subr.bf16.mxu0 %v1973
    %2671 = vmatpush2.bf16.msra.mxu0 %v1972
    %2672 = vmatprep.subr.bf16.mxu0 %v1969
    %2673 = vmatpush2.bf16.msra.mxu0 %v1968
    %2674 = vmatprep.subr.bf16.mxu0 %v1965
    %2675 = vmatpush2.bf16.msra.mxu0 %v1964
    %2676 = vmatprep.mubr.bf16.mxu0 %v50
    %2677 = vmatmul.mubr.bf16.gmra.mxu0 %v49
    %v2678 = vpop.f32.mrf.mxu0
    %v2679 = vadd.f32 %v2638, %v2678
    %v2680 = vpop.f32.mrf.mxu0
    %v2681 = vadd.f32 %v2640, %v2680
    %v2682 = vpop.f32.mrf.mxu0
    %v2683 = vpop.f32.mrf.mxu0
    %2684 = vdwg.mxu0
    %2685 = vmatprep.subr.bf16.mxu0 %v2025
    %2686 = vmatpush1.bf16.msra.mxu0 %v2024
    %2687 = vmatprep.subr.bf16.mxu0 %v2021
    %2688 = vmatpush1.bf16.msra.mxu0 %v2020
    %2689 = vmatprep.subr.bf16.mxu0 %v2017
    %2690 = vmatpush1.bf16.msra.mxu0 %v2016
    %2691 = vmatprep.subr.bf16.mxu0 %v2013
    %2692 = vmatpush1.bf16.msra.mxu0 %v2012
    %2693 = vmatprep.subr.bf16.mxu0 %v2009
    %2694 = vmatpush1.bf16.msra.mxu0 %v2008
    %2695 = vmatprep.subr.bf16.mxu0 %v2005
    %2696 = vmatpush1.bf16.msra.mxu0 %v2004
    %2697 = vmatprep.subr.bf16.mxu0 %v2001
    %2698 = vmatpush1.bf16.msra.mxu0 %v2000
    %2699 = vmatprep.subr.bf16.mxu0 %v1997
    %2700 = vmatpush1.bf16.msra.mxu0 %v1996
    %2701 = vmatprep.subr.bf16.mxu0 %v2057
    %2702 = vmatpush2.bf16.msra.mxu0 %v2056
    %2703 = vmatprep.subr.bf16.mxu0 %v2053
    %2704 = vmatpush2.bf16.msra.mxu0 %v2052
    %2705 = vmatprep.subr.bf16.mxu0 %v2049
    %2706 = vmatpush2.bf16.msra.mxu0 %v2048
    %2707 = vmatprep.subr.bf16.mxu0 %v2045
    %2708 = vmatpush2.bf16.msra.mxu0 %v2044
    %2709 = vmatprep.subr.bf16.mxu0 %v2041
    %2710 = vmatpush2.bf16.msra.mxu0 %v2040
    %2711 = vmatprep.subr.bf16.mxu0 %v2037
    %2712 = vmatpush2.bf16.msra.mxu0 %v2036
    %2713 = vmatprep.subr.bf16.mxu0 %v2033
    %2714 = vmatpush2.bf16.msra.mxu0 %v2032
    %2715 = vmatprep.subr.bf16.mxu0 %v2029
    %2716 = vmatpush2.bf16.msra.mxu0 %v2028
    %2717 = vmatprep.mubr.bf16.mxu0 %v52
    %2718 = vmatmul.mubr.bf16.gmra.mxu0 %v51
    %v2719 = vpop.f32.mrf.mxu0
    %v2720 = vadd.f32 %v2679, %v2719
    %v2721 = vpop.f32.mrf.mxu0
    %v2722 = vadd.f32 %v2681, %v2721
    %v2723 = vpop.f32.mrf.mxu0
    %v2724 = vpop.f32.mrf.mxu0
    %2725 = vdwg.mxu0
    %2726 = vmatprep.subr.bf16.mxu0 0
    %2727 = vmatpush1.bf16.msra.mxu0 0
    %2728 = vmatprep.subr.bf16.mxu0 0
    %2729 = vmatpush1.bf16.msra.mxu0 0
    %2730 = vmatprep.subr.bf16.mxu0 0
    %2731 = vmatpush1.bf16.msra.mxu0 0
    %2732 = vmatprep.subr.bf16.mxu0 0
    %2733 = vmatpush1.bf16.msra.mxu0 0
    %2734 = vmatprep.subr.bf16.mxu0 %v2073
    %2735 = vmatpush1.bf16.msra.mxu0 %v2072
    %2736 = vmatprep.subr.bf16.mxu0 %v2069
    %2737 = vmatpush1.bf16.msra.mxu0 %v2068
    %2738 = vmatprep.subr.bf16.mxu0 %v2065
    %2739 = vmatpush1.bf16.msra.mxu0 %v2064
    %2740 = vmatprep.subr.bf16.mxu0 %v2061
    %2741 = vmatpush1.bf16.msra.mxu0 %v2060
    %2742 = vmatprep.subr.bf16.mxu0 0
    %2743 = vmatpush2.bf16.msra.mxu0 0
    %2744 = vmatprep.subr.bf16.mxu0 0
    %2745 = vmatpush2.bf16.msra.mxu0 0
    %2746 = vmatprep.subr.bf16.mxu0 0
    %2747 = vmatpush2.bf16.msra.mxu0 0
    %2748 = vmatprep.subr.bf16.mxu0 0
    %2749 = vmatpush2.bf16.msra.mxu0 0
    %2750 = vmatprep.subr.bf16.mxu0 0
    %2751 = vmatpush2.bf16.msra.mxu0 0
    %2752 = vmatprep.subr.bf16.mxu0 0
    %2753 = vmatpush2.bf16.msra.mxu0 0
    %2754 = vmatprep.subr.bf16.mxu0 0
    %2755 = vmatpush2.bf16.msra.mxu0 0
    %2756 = vmatprep.subr.bf16.mxu0 0
    %2757 = vmatpush2.bf16.msra.mxu0 0
    %2758 = vmatprep.mubr.bf16.mxu0 0
    %2759 = vmatmul.mubr.bf16.gmra.mxu0 %v2478
    %v2760 = vpop.f32.mrf.mxu0
    %v2761 = vadd.f32 %v2720, %v2760
    %v2762 = vpop.f32.mrf.mxu0
    %v2763 = vadd.f32 %v2722, %v2762
    %v2764 = vpop.f32.mrf.mxu0
    %v2765 = vpop.f32.mrf.mxu0
    %2766 = vdwg.mxu0
    %2767 = vmatprep.subr.bf16.mxu0 %v1707
    %2768 = vmatpush1.bf16.msra.mxu0 %v1706
    %2769 = vmatprep.subr.bf16.mxu0 %v1703
    %2770 = vmatpush1.bf16.msra.mxu0 %v1702
    %2771 = vmatprep.subr.bf16.mxu0 %v1699
    %2772 = vmatpush1.bf16.msra.mxu0 %v1698
    %2773 = vmatprep.subr.bf16.mxu0 %v1695
    %2774 = vmatpush1.bf16.msra.mxu0 %v1694
    %2775 = vmatprep.subr.bf16.mxu0 %v1691
    %2776 = vmatpush1.bf16.msra.mxu0 %v1690
    %2777 = vmatprep.subr.bf16.mxu0 %v1687
    %2778 = vmatpush1.bf16.msra.mxu0 %v1686
    %2779 = vmatprep.subr.bf16.mxu0 %v1683
    %2780 = vmatpush1.bf16.msra.mxu0 %v1682
    %2781 = vmatprep.subr.bf16.mxu0 %v1679
    %2782 = vmatpush1.bf16.msra.mxu0 %v1678
    %2783 = vmatprep.subr.bf16.mxu0 %v1739
    %2784 = vmatpush2.bf16.msra.mxu0 %v1738
    %2785 = vmatprep.subr.bf16.mxu0 %v1735
    %2786 = vmatpush2.bf16.msra.mxu0 %v1734
    %2787 = vmatprep.subr.bf16.mxu0 %v1731
    %2788 = vmatpush2.bf16.msra.mxu0 %v1730
    %2789 = vmatprep.subr.bf16.mxu0 %v1727
    %2790 = vmatpush2.bf16.msra.mxu0 %v1726
    %2791 = vmatprep.subr.bf16.mxu0 %v1723
    %2792 = vmatpush2.bf16.msra.mxu0 %v1722
    %2793 = vmatprep.subr.bf16.mxu0 %v1719
    %2794 = vmatpush2.bf16.msra.mxu0 %v1718
    %2795 = vmatprep.subr.bf16.mxu0 %v1715
    %2796 = vmatpush2.bf16.msra.mxu0 %v1714
    %2797 = vmatprep.subr.bf16.mxu0 %v1711
    %2798 = vmatpush2.bf16.msra.mxu0 %v1710
    %2799 = vmatprep.mubr.bf16.mxu0 %v42
    %2800 = vmatmul.mubr.bf16.gmra.mxu0 %v41
    %v2801 = vpop.f32.mrf.mxu0
    %v2802 = vadd.f32 %v467, %v2801
    %v2803 = vpop.f32.mrf.mxu0
    %v2804 = vadd.f32 %v471, %v2803
    %v2805 = vpop.f32.mrf.mxu0
    %v2806 = vpop.f32.mrf.mxu0
    %2807 = vdwg.mxu0
    %2808 = vmatprep.subr.bf16.mxu0 %v1771
    %2809 = vmatpush1.bf16.msra.mxu0 %v1770
    %2810 = vmatprep.subr.bf16.mxu0 %v1767
    %2811 = vmatpush1.bf16.msra.mxu0 %v1766
    %2812 = vmatprep.subr.bf16.mxu0 %v1763
    %2813 = vmatpush1.bf16.msra.mxu0 %v1762
    %2814 = vmatprep.subr.bf16.mxu0 %v1759
    %2815 = vmatpush1.bf16.msra.mxu0 %v1758
    %2816 = vmatprep.subr.bf16.mxu0 %v1755
    %2817 = vmatpush1.bf16.msra.mxu0 %v1754
    %2818 = vmatprep.subr.bf16.mxu0 %v1751
    %2819 = vmatpush1.bf16.msra.mxu0 %v1750
    %2820 = vmatprep.subr.bf16.mxu0 %v1747
    %2821 = vmatpush1.bf16.msra.mxu0 %v1746
    %2822 = vmatprep.subr.bf16.mxu0 %v1743
    %2823 = vmatpush1.bf16.msra.mxu0 %v1742
    %2824 = vmatprep.subr.bf16.mxu0 %v1803
    %2825 = vmatpush2.bf16.msra.mxu0 %v1802
    %2826 = vmatprep.subr.bf16.mxu0 %v1799
    %2827 = vmatpush2.bf16.msra.mxu0 %v1798
    %2828 = vmatprep.subr.bf16.mxu0 %v1795
    %2829 = vmatpush2.bf16.msra.mxu0 %v1794
    %2830 = vmatprep.subr.bf16.mxu0 %v1791
    %2831 = vmatpush2.bf16.msra.mxu0 %v1790
    %2832 = vmatprep.subr.bf16.mxu0 %v1787
    %2833 = vmatpush2.bf16.msra.mxu0 %v1786
    %2834 = vmatprep.subr.bf16.mxu0 %v1783
    %2835 = vmatpush2.bf16.msra.mxu0 %v1782
    %2836 = vmatprep.subr.bf16.mxu0 %v1779
    %2837 = vmatpush2.bf16.msra.mxu0 %v1778
    %2838 = vmatprep.subr.bf16.mxu0 %v1775
    %2839 = vmatpush2.bf16.msra.mxu0 %v1774
    %2840 = vmatprep.mubr.bf16.mxu0 %v44
    %2841 = vmatmul.mubr.bf16.gmra.mxu0 %v43
    %v2842 = vpop.f32.mrf.mxu0
    %v2843 = vadd.f32 %v2802, %v2842
    %v2844 = vpop.f32.mrf.mxu0
    %v2845 = vadd.f32 %v2804, %v2844
    %v2846 = vpop.f32.mrf.mxu0
    %v2847 = vpop.f32.mrf.mxu0
    %2848 = vdwg.mxu0
    %2849 = vmatprep.subr.bf16.mxu0 %v1835
    %2850 = vmatpush1.bf16.msra.mxu0 %v1834
    %2851 = vmatprep.subr.bf16.mxu0 %v1831
    %2852 = vmatpush1.bf16.msra.mxu0 %v1830
    %2853 = vmatprep.subr.bf16.mxu0 %v1827
    %2854 = vmatpush1.bf16.msra.mxu0 %v1826
    %2855 = vmatprep.subr.bf16.mxu0 %v1823
    %2856 = vmatpush1.bf16.msra.mxu0 %v1822
    %2857 = vmatprep.subr.bf16.mxu0 %v1819
    %2858 = vmatpush1.bf16.msra.mxu0 %v1818
    %2859 = vmatprep.subr.bf16.mxu0 %v1815
    %2860 = vmatpush1.bf16.msra.mxu0 %v1814
    %2861 = vmatprep.subr.bf16.mxu0 %v1811
    %2862 = vmatpush1.bf16.msra.mxu0 %v1810
    %2863 = vmatprep.subr.bf16.mxu0 %v1807
    %2864 = vmatpush1.bf16.msra.mxu0 %v1806
    %2865 = vmatprep.subr.bf16.mxu0 %v1867
    %2866 = vmatpush2.bf16.msra.mxu0 %v1866
    %2867 = vmatprep.subr.bf16.mxu0 %v1863
    %2868 = vmatpush2.bf16.msra.mxu0 %v1862
    %2869 = vmatprep.subr.bf16.mxu0 %v1859
    %2870 = vmatpush2.bf16.msra.mxu0 %v1858
    %2871 = vmatprep.subr.bf16.mxu0 %v1855
    %2872 = vmatpush2.bf16.msra.mxu0 %v1854
    %2873 = vmatprep.subr.bf16.mxu0 %v1851
    %2874 = vmatpush2.bf16.msra.mxu0 %v1850
    %2875 = vmatprep.subr.bf16.mxu0 %v1847
    %2876 = vmatpush2.bf16.msra.mxu0 %v1846
    %2877 = vmatprep.subr.bf16.mxu0 %v1843
    %2878 = vmatpush2.bf16.msra.mxu0 %v1842
    %2879 = vmatprep.subr.bf16.mxu0 %v1839
    %2880 = vmatpush2.bf16.msra.mxu0 %v1838
    %2881 = vmatprep.mubr.bf16.mxu0 %v46
    %2882 = vmatmul.mubr.bf16.gmra.mxu0 %v45
    %v2883 = vpop.f32.mrf.mxu0
    %v2884 = vadd.f32 %v2843, %v2883
    %v2885 = vpop.f32.mrf.mxu0
    %v2886 = vadd.f32 %v2845, %v2885
    %v2887 = vpop.f32.mrf.mxu0
    %v2888 = vpop.f32.mrf.mxu0
    %2889 = vdwg.mxu0
    %2890 = vmatprep.subr.bf16.mxu0 %v1899
    %2891 = vmatpush1.bf16.msra.mxu0 %v1898
    %2892 = vmatprep.subr.bf16.mxu0 %v1895
    %2893 = vmatpush1.bf16.msra.mxu0 %v1894
    %2894 = vmatprep.subr.bf16.mxu0 %v1891
    %2895 = vmatpush1.bf16.msra.mxu0 %v1890
    %2896 = vmatprep.subr.bf16.mxu0 %v1887
    %2897 = vmatpush1.bf16.msra.mxu0 %v1886
    %2898 = vmatprep.subr.bf16.mxu0 %v1883
    %2899 = vmatpush1.bf16.msra.mxu0 %v1882
    %2900 = vmatprep.subr.bf16.mxu0 %v1879
    %2901 = vmatpush1.bf16.msra.mxu0 %v1878
    %2902 = vmatprep.subr.bf16.mxu0 %v1875
    %2903 = vmatpush1.bf16.msra.mxu0 %v1874
    %2904 = vmatprep.subr.bf16.mxu0 %v1871
    %2905 = vmatpush1.bf16.msra.mxu0 %v1870
    %2906 = vmatprep.subr.bf16.mxu0 %v1931
    %2907 = vmatpush2.bf16.msra.mxu0 %v1930
    %2908 = vmatprep.subr.bf16.mxu0 %v1927
    %2909 = vmatpush2.bf16.msra.mxu0 %v1926
    %2910 = vmatprep.subr.bf16.mxu0 %v1923
    %2911 = vmatpush2.bf16.msra.mxu0 %v1922
    %2912 = vmatprep.subr.bf16.mxu0 %v1919
    %2913 = vmatpush2.bf16.msra.mxu0 %v1918
    %2914 = vmatprep.subr.bf16.mxu0 %v1915
    %2915 = vmatpush2.bf16.msra.mxu0 %v1914
    %2916 = vmatprep.subr.bf16.mxu0 %v1911
    %2917 = vmatpush2.bf16.msra.mxu0 %v1910
    %2918 = vmatprep.subr.bf16.mxu0 %v1907
    %2919 = vmatpush2.bf16.msra.mxu0 %v1906
    %2920 = vmatprep.subr.bf16.mxu0 %v1903
    %2921 = vmatpush2.bf16.msra.mxu0 %v1902
    %2922 = vmatprep.mubr.bf16.mxu0 %v48
    %2923 = vmatmul.mubr.bf16.gmra.mxu0 %v47
    %v2924 = vpop.f32.mrf.mxu0
    %v2925 = vadd.f32 %v2884, %v2924
    %v2926 = vpop.f32.mrf.mxu0
    %v2927 = vadd.f32 %v2886, %v2926
    %v2928 = vpop.f32.mrf.mxu0
    %v2929 = vpop.f32.mrf.mxu0
    %2930 = vdwg.mxu0
    %2931 = vmatprep.subr.bf16.mxu0 %v1963
    %2932 = vmatpush1.bf16.msra.mxu0 %v1962
    %2933 = vmatprep.subr.bf16.mxu0 %v1959
    %2934 = vmatpush1.bf16.msra.mxu0 %v1958
    %2935 = vmatprep.subr.bf16.mxu0 %v1955
    %2936 = vmatpush1.bf16.msra.mxu0 %v1954
    %2937 = vmatprep.subr.bf16.mxu0 %v1951
    %2938 = vmatpush1.bf16.msra.mxu0 %v1950
    %2939 = vmatprep.subr.bf16.mxu0 %v1947
    %2940 = vmatpush1.bf16.msra.mxu0 %v1946
    %2941 = vmatprep.subr.bf16.mxu0 %v1943
    %2942 = vmatpush1.bf16.msra.mxu0 %v1942
    %2943 = vmatprep.subr.bf16.mxu0 %v1939
    %2944 = vmatpush1.bf16.msra.mxu0 %v1938
    %2945 = vmatprep.subr.bf16.mxu0 %v1935
    %2946 = vmatpush1.bf16.msra.mxu0 %v1934
    %2947 = vmatprep.subr.bf16.mxu0 %v1995
    %2948 = vmatpush2.bf16.msra.mxu0 %v1994
    %2949 = vmatprep.subr.bf16.mxu0 %v1991
    %2950 = vmatpush2.bf16.msra.mxu0 %v1990
    %2951 = vmatprep.subr.bf16.mxu0 %v1987
    %2952 = vmatpush2.bf16.msra.mxu0 %v1986
    %2953 = vmatprep.subr.bf16.mxu0 %v1983
    %2954 = vmatpush2.bf16.msra.mxu0 %v1982
    %2955 = vmatprep.subr.bf16.mxu0 %v1979
    %2956 = vmatpush2.bf16.msra.mxu0 %v1978
    %2957 = vmatprep.subr.bf16.mxu0 %v1975
    %2958 = vmatpush2.bf16.msra.mxu0 %v1974
    %2959 = vmatprep.subr.bf16.mxu0 %v1971
    %2960 = vmatpush2.bf16.msra.mxu0 %v1970
    %2961 = vmatprep.subr.bf16.mxu0 %v1967
    %2962 = vmatpush2.bf16.msra.mxu0 %v1966
    %2963 = vmatprep.mubr.bf16.mxu0 %v50
    %2964 = vmatmul.mubr.bf16.gmra.mxu0 %v49
    %v2965 = vpop.f32.mrf.mxu0
    %v2966 = vadd.f32 %v2925, %v2965
    %v2967 = vpop.f32.mrf.mxu0
    %v2968 = vadd.f32 %v2927, %v2967
    %v2969 = vpop.f32.mrf.mxu0
    %v2970 = vpop.f32.mrf.mxu0
    %2971 = vdwg.mxu0
    %2972 = vmatprep.subr.bf16.mxu0 %v2027
    %2973 = vmatpush1.bf16.msra.mxu0 %v2026
    %2974 = vmatprep.subr.bf16.mxu0 %v2023
    %2975 = vmatpush1.bf16.msra.mxu0 %v2022
    %2976 = vmatprep.subr.bf16.mxu0 %v2019
    %2977 = vmatpush1.bf16.msra.mxu0 %v2018
    %2978 = vmatprep.subr.bf16.mxu0 %v2015
    %2979 = vmatpush1.bf16.msra.mxu0 %v2014
    %2980 = vmatprep.subr.bf16.mxu0 %v2011
    %2981 = vmatpush1.bf16.msra.mxu0 %v2010
    %2982 = vmatprep.subr.bf16.mxu0 %v2007
    %2983 = vmatpush1.bf16.msra.mxu0 %v2006
    %2984 = vmatprep.subr.bf16.mxu0 %v2003
    %2985 = vmatpush1.bf16.msra.mxu0 %v2002
    %2986 = vmatprep.subr.bf16.mxu0 %v1999
    %2987 = vmatpush1.bf16.msra.mxu0 %v1998
    %2988 = vmatprep.subr.bf16.mxu0 %v2059
    %2989 = vmatpush2.bf16.msra.mxu0 %v2058
    %2990 = vmatprep.subr.bf16.mxu0 %v2055
    %2991 = vmatpush2.bf16.msra.mxu0 %v2054
    %2992 = vmatprep.subr.bf16.mxu0 %v2051
    %2993 = vmatpush2.bf16.msra.mxu0 %v2050
    %2994 = vmatprep.subr.bf16.mxu0 %v2047
    %2995 = vmatpush2.bf16.msra.mxu0 %v2046
    %2996 = vmatprep.subr.bf16.mxu0 %v2043
    %2997 = vmatpush2.bf16.msra.mxu0 %v2042
    %2998 = vmatprep.subr.bf16.mxu0 %v2039
    %2999 = vmatpush2.bf16.msra.mxu0 %v2038
    %3000 = vmatprep.subr.bf16.mxu0 %v2035
    %3001 = vmatpush2.bf16.msra.mxu0 %v2034
    %3002 = vmatprep.subr.bf16.mxu0 %v2031
    %3003 = vmatpush2.bf16.msra.mxu0 %v2030
    %3004 = vmatprep.mubr.bf16.mxu0 %v52
    %3005 = vmatmul.mubr.bf16.gmra.mxu0 %v51
    %v3006 = vpop.f32.mrf.mxu0
    %v3007 = vadd.f32 %v2966, %v3006
    %v3008 = vpop.f32.mrf.mxu0
    %v3009 = vadd.f32 %v2968, %v3008
    %v3010 = vpop.f32.mrf.mxu0
    %v3011 = vpop.f32.mrf.mxu0
    %3012 = vdwg.mxu0
    %3013 = vmatprep.subr.bf16.mxu0 0
    %3014 = vmatpush1.bf16.msra.mxu0 0
    %3015 = vmatprep.subr.bf16.mxu0 0
    %3016 = vmatpush1.bf16.msra.mxu0 0
    %3017 = vmatprep.subr.bf16.mxu0 0
    %3018 = vmatpush1.bf16.msra.mxu0 0
    %3019 = vmatprep.subr.bf16.mxu0 0
    %3020 = vmatpush1.bf16.msra.mxu0 0
    %3021 = vmatprep.subr.bf16.mxu0 %v2075
    %3022 = vmatpush1.bf16.msra.mxu0 %v2074
    %3023 = vmatprep.subr.bf16.mxu0 %v2071
    %3024 = vmatpush1.bf16.msra.mxu0 %v2070
    %3025 = vmatprep.subr.bf16.mxu0 %v2067
    %3026 = vmatpush1.bf16.msra.mxu0 %v2066
    %3027 = vmatprep.subr.bf16.mxu0 %v2063
    %3028 = vmatpush1.bf16.msra.mxu0 %v2062
    %3029 = vmatprep.subr.bf16.mxu0 0
    %3030 = vmatpush2.bf16.msra.mxu0 0
    %3031 = vmatprep.subr.bf16.mxu0 0
    %3032 = vmatpush2.bf16.msra.mxu0 0
    %3033 = vmatprep.subr.bf16.mxu0 0
    %3034 = vmatpush2.bf16.msra.mxu0 0
    %3035 = vmatprep.subr.bf16.mxu0 0
    %3036 = vmatpush2.bf16.msra.mxu0 0
    %3037 = vmatprep.subr.bf16.mxu0 0
    %3038 = vmatpush2.bf16.msra.mxu0 0
    %3039 = vmatprep.subr.bf16.mxu0 0
    %3040 = vmatpush2.bf16.msra.mxu0 0
    %3041 = vmatprep.subr.bf16.mxu0 0
    %3042 = vmatpush2.bf16.msra.mxu0 0
    %3043 = vmatprep.subr.bf16.mxu0 0
    %3044 = vmatpush2.bf16.msra.mxu0 0
    %3045 = vmatprep.mubr.bf16.mxu0 0
    %3046 = vmatmul.mubr.bf16.gmra.mxu0 %v2478
    %v3047 = vpop.f32.mrf.mxu0
    %v3048 = vadd.f32 %v3007, %v3047
    %v3049 = vpop.f32.mrf.mxu0
    %v3050 = vadd.f32 %v3009, %v3049
    %v3051 = vpop.f32.mrf.mxu0
    %v3052 = vpop.f32.mrf.mxu0
    %3053 = vdwg.mxu0
    %vm3054 = vcmp.gt.f32.partialorder %v2761, 0.0
    %vm3055 = vcmp.gt.f32.partialorder %v2763, 0.0
    %vm3056 = vcmp.gt.f32.partialorder %v3048, 0.0
    %vm3057 = vcmp.gt.f32.partialorder %v3050, 0.0
    %v3058 = vmul.f32 %v2761, 0.01
    %v3059 = vmul.f32 %v2763, 0.01
    %v3060 = vmul.f32 %v3048, 0.01
    %v3061 = vmul.f32 %v3050, 0.01
    %v3062 = vsel %vm3054, %v2761, %v3058
    %v3063 = vsel %vm3055, %v2763, %v3059
    %v3064 = vsel %vm3056, %v3048, %v3060
    %v3065 = vsel %vm3057, %v3050, %v3061
    %v3066 = vpack.c.bf16 %v3062, %v3062
    %v3067 = vpack.c.bf16 %v3063, %v3063
    %v3068 = vpack.c.bf16 %v3064, %v3064
    %v3069 = vpack.c.bf16 %v3065, %v3065
    %v3070 = vld [vmem:[%s3] sm:$0xf]
    %v3071 = vld [vmem:[%s3 + $0x4] sm:$0xf]
    %v3072 = vld [vmem:[%s3 + $0x8] sm:$0xf]
    %v3073 = vld [vmem:[%s3 + $0xc] sm:$0xf]
    %v3074 = vld [vmem:[%s3 + $0x10] sm:$0xf]
    %v3075 = vld [vmem:[%s3 + $0x14] sm:$0xf]
    %v3076 = vld [vmem:[%s3 + $0x18] sm:$0xf]
    %v3077 = vld [vmem:[%s3 + $0x1c] sm:$0xf]
    %v3078 = vld [vmem:[%s3 + $0x20] sm:$0xf]
    %v3079 = vld [vmem:[%s3 + $0x24] sm:$0xf]
    %v3080 = vld [vmem:[%s3 + $0x28] sm:$0xf]
    %v3081 = vld [vmem:[%s3 + $0x2c] sm:$0xf]
    %v3082 = vld [vmem:[%s3 + $0x30] sm:$0xf]
    %v3083 = vld [vmem:[%s3 + $0x34] sm:$0xf]
    %v3084 = vld [vmem:[%s3 + $0x38] sm:$0xf]
    %v3085 = vld [vmem:[%s3 + $0x3c] sm:$0xf]
    %v3086 = vld [vmem:[%s3 + $0x40] sm:$0xf]
    %v3087 = vld [vmem:[%s3 + $0x44] sm:$0xf]
    %v3088 = vld [vmem:[%s3 + $0x48] sm:$0xf]
    %v3089 = vld [vmem:[%s3 + $0x4c] sm:$0xf]
    %v3090 = vld [vmem:[%s3 + $0x50] sm:$0xf]
    %v3091 = vld [vmem:[%s3 + $0x54] sm:$0xf]
    %v3092 = vld [vmem:[%s3 + $0x58] sm:$0xf]
    %v3093 = vld [vmem:[%s3 + $0x5c] sm:$0xf]
    %v3094 = vld [vmem:[%s3 + $0x60] sm:$0xf]
    %v3095 = vld [vmem:[%s3 + $0x64] sm:$0xf]
    %v3096 = vld [vmem:[%s3 + $0x68] sm:$0xf]
    %v3097 = vld [vmem:[%s3 + $0x6c] sm:$0xf]
    %v3098 = vld [vmem:[%s3 + $0x70] sm:$0xf]
    %v3099 = vld [vmem:[%s3 + $0x74] sm:$0xf]
    %v3100 = vld [vmem:[%s3 + $0x78] sm:$0xf]
    %v3101 = vld [vmem:[%s3 + $0x7c] sm:$0xf]
    %v3102 = vld [vmem:[%s3 + $0x80] sm:$0xf]
    %v3103 = vld [vmem:[%s3 + $0x84] sm:$0xf]
    %v3104 = vld [vmem:[%s3 + $0x88] sm:$0xf]
    %v3105 = vld [vmem:[%s3 + $0x8c] sm:$0xf]
    %v3106 = vld [vmem:[%s3 + $0x90] sm:$0xf]
    %v3107 = vld [vmem:[%s3 + $0x94] sm:$0xf]
    %v3108 = vld [vmem:[%s3 + $0x98] sm:$0xf]
    %v3109 = vld [vmem:[%s3 + $0x9c] sm:$0xf]
    %v3110 = vld [vmem:[%s3 + $0xa0] sm:$0xf]
    %v3111 = vld [vmem:[%s3 + $0xa4] sm:$0xf]
    %v3112 = vld [vmem:[%s3 + $0xa8] sm:$0xf]
    %v3113 = vld [vmem:[%s3 + $0xac] sm:$0xf]
    %v3114 = vld [vmem:[%s3 + $0xb0] sm:$0xf]
    %v3115 = vld [vmem:[%s3 + $0xb4] sm:$0xf]
    %v3116 = vld [vmem:[%s3 + $0xb8] sm:$0xf]
    %v3117 = vld [vmem:[%s3 + $0xbc] sm:$0xf]
    %v3118 = vld [vmem:[%s3 + $0xc0] sm:$0xf]
    %v3119 = vld [vmem:[%s3 + $0xc4] sm:$0xf]
    %v3120 = vld [vmem:[%s4] sm:$0x1]
    %v3122 = vlaneseq
    %v3123 = vshrl.u32 %v3122, 7
    %v3124 = vsub.s32 0, %v3123
    %v3125 = vrot.slane %v3120, %v3124
    %v3177 = vunpack.c.l.b16 %v3070
    %v3178 = vunpack.c.l.b16 %v3071
    %v3179 = vunpack.c.l.b16 %v3072
    %v3180 = vunpack.c.l.b16 %v3073
    %v3181 = vunpack.c.l.b16 %v3074
    %v3182 = vunpack.c.l.b16 %v3075
    %v3183 = vunpack.c.l.b16 %v3076
    %v3184 = vunpack.c.l.b16 %v3077
    %v3185 = vunpack.c.l.b16 %v3078
    %v3186 = vunpack.c.l.b16 %v3079
    %v3187 = vunpack.c.l.b16 %v3080
    %v3188 = vunpack.c.l.b16 %v3081
    %v3189 = vunpack.c.l.b16 %v3082
    %v3190 = vunpack.c.l.b16 %v3083
    %v3191 = vunpack.c.l.b16 %v3084
    %v3192 = vunpack.c.l.b16 %v3085
    %v3193 = vunpack.c.l.b16 %v3086
    %v3194 = vunpack.c.l.b16 %v3087
    %v3195 = vunpack.c.l.b16 %v3088
    %v3196 = vunpack.c.l.b16 %v3089
    %v3197 = vunpack.c.l.b16 %v3090
    %v3198 = vunpack.c.l.b16 %v3091
    %v3199 = vunpack.c.l.b16 %v3092
    %v3200 = vunpack.c.l.b16 %v3093
    %v3201 = vunpack.c.l.b16 %v3094
    %v3202 = vunpack.c.l.b16 %v3095
    %v3203 = vunpack.c.l.b16 %v3096
    %v3204 = vunpack.c.l.b16 %v3097
    %v3205 = vunpack.c.l.b16 %v3098
    %v3206 = vunpack.c.l.b16 %v3099
    %v3207 = vunpack.c.l.b16 %v3100
    %v3208 = vunpack.c.l.b16 %v3101
    %v3209 = vunpack.c.l.b16 %v3102
    %v3210 = vunpack.c.l.b16 %v3103
    %v3211 = vunpack.c.l.b16 %v3104
    %v3212 = vunpack.c.l.b16 %v3105
    %v3213 = vunpack.c.l.b16 %v3106
    %v3214 = vunpack.c.l.b16 %v3107
    %v3215 = vunpack.c.l.b16 %v3108
    %v3216 = vunpack.c.l.b16 %v3109
    %v3217 = vunpack.c.l.b16 %v3110
    %v3218 = vunpack.c.l.b16 %v3111
    %v3219 = vunpack.c.l.b16 %v3112
    %v3220 = vunpack.c.l.b16 %v3113
    %v3221 = vunpack.c.l.b16 %v3114
    %v3222 = vunpack.c.l.b16 %v3115
    %v3223 = vunpack.c.l.b16 %v3116
    %v3224 = vunpack.c.l.b16 %v3117
    %v3225 = vunpack.c.l.b16 %v3118
    %v3226 = vunpack.c.l.b16 %v3119
    %v3227 = vpack.c.b16 %v3178, %v3177
    %v3228 = vpack.c.b16 %v3180, %v3179
    %v3229 = vpack.c.b16 %v3182, %v3181
    %v3230 = vpack.c.b16 %v3184, %v3183
    %v3231 = vpack.c.b16 %v3186, %v3185
    %v3232 = vpack.c.b16 %v3188, %v3187
    %v3233 = vpack.c.b16 %v3190, %v3189
    %v3234 = vpack.c.b16 %v3192, %v3191
    %v3235 = vpack.c.b16 %v3194, %v3193
    %v3236 = vpack.c.b16 %v3196, %v3195
    %v3237 = vpack.c.b16 %v3198, %v3197
    %v3238 = vpack.c.b16 %v3200, %v3199
    %v3239 = vpack.c.b16 %v3202, %v3201
    %v3240 = vpack.c.b16 %v3204, %v3203
    %v3241 = vpack.c.b16 %v3206, %v3205
    %v3242 = vpack.c.b16 %v3208, %v3207
    %v3243 = vpack.c.b16 %v3210, %v3209
    %v3244 = vpack.c.b16 %v3212, %v3211
    %v3245 = vpack.c.b16 %v3214, %v3213
    %v3246 = vpack.c.b16 %v3216, %v3215
    %v3247 = vpack.c.b16 %v3218, %v3217
    %v3248 = vpack.c.b16 %v3220, %v3219
    %v3249 = vpack.c.b16 %v3222, %v3221
    %v3250 = vpack.c.b16 %v3224, %v3223
    %v3251 = vpack.c.b16 %v3226, %v3225
    %vm3277 = vcmask 130048
    %v3279 = vsel %vm3277, %v3069, 0
    %3281 = vmatprep.subr.bf16.mxu0 0
    %3282 = vmatpush1.bf16.msra.mxu0 %v3234
    %3283 = vmatprep.subr.bf16.mxu0 0
    %3284 = vmatpush1.bf16.msra.mxu0 %v3233
    %3285 = vmatprep.subr.bf16.mxu0 0
    %3286 = vmatpush1.bf16.msra.mxu0 %v3232
    %3287 = vmatprep.subr.bf16.mxu0 0
    %3288 = vmatpush1.bf16.msra.mxu0 %v3231
    %3289 = vmatprep.subr.bf16.mxu0 0
    %3290 = vmatpush1.bf16.msra.mxu0 %v3230
    %3291 = vmatprep.subr.bf16.mxu0 0
    %3292 = vmatpush1.bf16.msra.mxu0 %v3229
    %3293 = vmatprep.subr.bf16.mxu0 0
    %3294 = vmatpush1.bf16.msra.mxu0 %v3228
    %3295 = vmatprep.subr.bf16.mxu0 0
    %3296 = vmatpush1.bf16.msra.mxu0 %v3227
    %3297 = vmatprep.subr.bf16.mxu0 0
    %3298 = vmatpush2.bf16.msra.mxu0 %v3242
    %3299 = vmatprep.subr.bf16.mxu0 0
    %3300 = vmatpush2.bf16.msra.mxu0 %v3241
    %3301 = vmatprep.subr.bf16.mxu0 0
    %3302 = vmatpush2.bf16.msra.mxu0 %v3240
    %3303 = vmatprep.subr.bf16.mxu0 0
    %3304 = vmatpush2.bf16.msra.mxu0 %v3239
    %3305 = vmatprep.subr.bf16.mxu0 0
    %3306 = vmatpush2.bf16.msra.mxu0 %v3238
    %3307 = vmatprep.subr.bf16.mxu0 0
    %3308 = vmatpush2.bf16.msra.mxu0 %v3237
    %3309 = vmatprep.subr.bf16.mxu0 0
    %3310 = vmatpush2.bf16.msra.mxu0 %v3236
    %3311 = vmatprep.subr.bf16.mxu0 0
    %3312 = vmatpush2.bf16.msra.mxu0 %v3235
    %3313 = vmatprep.mubr.bf16.mxu0 %v3067
    %3314 = vmatmul.mubr.bf16.gmra.mxu0 %v3066
    %v3315 = vpop.f32.mrf.mxu0
    %v3316 = vadd.f32 %v3125, %v3315
    %v3317 = vpop.f32.mrf.mxu0
    %v3318 = vpop.f32.mrf.mxu0
    %v3319 = vpop.f32.mrf.mxu0
    %3320 = vdwg.mxu0
    %3321 = vmatprep.subr.bf16.mxu0 0
    %3322 = vmatpush1.bf16.msra.mxu0 %v3250
    %3323 = vmatprep.subr.bf16.mxu0 0
    %3324 = vmatpush1.bf16.msra.mxu0 %v3249
    %3325 = vmatprep.subr.bf16.mxu0 0
    %3326 = vmatpush1.bf16.msra.mxu0 %v3248
    %3327 = vmatprep.subr.bf16.mxu0 0
    %3328 = vmatpush1.bf16.msra.mxu0 %v3247
    %3329 = vmatprep.subr.bf16.mxu0 0
    %3330 = vmatpush1.bf16.msra.mxu0 %v3246
    %3331 = vmatprep.subr.bf16.mxu0 0
    %3332 = vmatpush1.bf16.msra.mxu0 %v3245
    %3333 = vmatprep.subr.bf16.mxu0 0
    %3334 = vmatpush1.bf16.msra.mxu0 %v3244
    %3335 = vmatprep.subr.bf16.mxu0 0
    %3336 = vmatpush1.bf16.msra.mxu0 %v3243
    %3337 = vmatprep.subr.bf16.mxu0 0
    %3338 = vmatpush2.bf16.msra.mxu0 0
    %3339 = vmatprep.subr.bf16.mxu0 0
    %3340 = vmatpush2.bf16.msra.mxu0 0
    %3341 = vmatprep.subr.bf16.mxu0 0
    %3342 = vmatpush2.bf16.msra.mxu0 0
    %3343 = vmatprep.subr.bf16.mxu0 0
    %3344 = vmatpush2.bf16.msra.mxu0 0
    %3345 = vmatprep.subr.bf16.mxu0 0
    %3346 = vmatpush2.bf16.msra.mxu0 0
    %3347 = vmatprep.subr.bf16.mxu0 0
    %3348 = vmatpush2.bf16.msra.mxu0 0
    %3349 = vmatprep.subr.bf16.mxu0 0
    %3350 = vmatpush2.bf16.msra.mxu0 0
    %3351 = vmatprep.subr.bf16.mxu0 0
    %3352 = vmatpush2.bf16.msra.mxu0 %v3251
    %3353 = vmatprep.mubr.bf16.mxu0 %v3279
    %3354 = vmatmul.mubr.bf16.gmra.mxu0 %v3068
    %v3355 = vpop.f32.mrf.mxu0
    %v3356 = vadd.f32 %v3316, %v3355
    %v3357 = vpop.f32.mrf.mxu0
    %v3358 = vpop.f32.mrf.mxu0
    %v3359 = vpop.f32.mrf.mxu0
    %3360 = vdwg.mxu0
    %vm3361 = vcmp.gt.f32.partialorder %v3356, 0.0
    %v3362 = vmul.f32 %v3356, 0.01
    %v3363 = vsel %vm3361, %v3356, %v3362
    %v3364 = vpack.c.bf16 %v3363, %v3363
    %v3365 = vld [vmem:[%s5] sm:$0xf]
    %v3366 = vld [vmem:[%s5 + $0x4] sm:$0xf]
    %v3367 = vld [vmem:[%s5 + $0x8] sm:$0xf]
    %v3368 = vld [vmem:[%s5 + $0xc] sm:$0xf]
    %v3369 = vld [vmem:[%s5 + $0x10] sm:$0xf]
    %v3370 = vld [vmem:[%s5 + $0x14] sm:$0xf]
    %v3371 = vld [vmem:[%s5 + $0x18] sm:$0xf]
    %v3372 = vld [vmem:[%s5 + $0x1c] sm:$0xf]
    %v3373 = vld [vmem:[%s5 + $0x20] sm:$0xf]
    %v3374 = vld [vmem:[%s5 + $0x24] sm:$0xf]
    %v3375 = vld [vmem:[%s5 + $0x28] sm:$0xf]
    %v3376 = vld [vmem:[%s5 + $0x2c] sm:$0xf]
    %v3377 = vld [vmem:[%s5 + $0x30] sm:$0x3]
    %v3378 = vld [vmem:[%s6] sm:$0x1]
    %v3380 = vlaneseq
    %v3381 = vshrl.u32 %v3380, 7
    %v3382 = vsub.s32 0, %v3381
    %v3383 = vrot.slane %v3378, %v3382
    %v3398 = vunpack.c.l.b16 %v3365
    %v3399 = vunpack.c.l.b16 %v3366
    %v3400 = vunpack.c.l.b16 %v3367
    %v3401 = vunpack.c.l.b16 %v3368
    %v3402 = vunpack.c.l.b16 %v3369
    %v3403 = vunpack.c.l.b16 %v3370
    %v3404 = vunpack.c.l.b16 %v3371
    %v3405 = vunpack.c.l.b16 %v3372
    %v3406 = vunpack.c.l.b16 %v3373
    %v3407 = vunpack.c.l.b16 %v3374
    %v3408 = vunpack.c.l.b16 %v3375
    %v3409 = vunpack.c.l.b16 %v3376
    %v3410 = vunpack.c.l.b16 %v3377
    %v3411 = vpack.c.b16 %v3399, %v3398
    %v3412 = vpack.c.b16 %v3401, %v3400
    %v3413 = vpack.c.b16 %v3403, %v3402
    %v3414 = vpack.c.b16 %v3405, %v3404
    %v3415 = vpack.c.b16 %v3407, %v3406
    %v3416 = vpack.c.b16 %v3409, %v3408
    %v3417 = vpack.c.b16 %v3410, %v3410
    %vm3424 = vcmask 818176
    %v3426 = vsel %vm3424, %v3364, 0
    %vm3428 = vcmask 1041408
    %v3430 = vsel %vm3428, %v3417, 0
    %3432 = vmatprep.subr.bf16.mxu0 0
    %3433 = vmatpush1.bf16.msra.mxu0 0
    %3434 = vmatprep.subr.bf16.mxu0 0
    %3435 = vmatpush1.bf16.msra.mxu0 %v3430
    %3436 = vmatprep.subr.bf16.mxu0 0
    %3437 = vmatpush1.bf16.msra.mxu0 %v3416
    %3438 = vmatprep.subr.bf16.mxu0 0
    %3439 = vmatpush1.bf16.msra.mxu0 %v3415
    %3440 = vmatprep.subr.bf16.mxu0 0
    %3441 = vmatpush1.bf16.msra.mxu0 %v3414
    %3442 = vmatprep.subr.bf16.mxu0 0
    %3443 = vmatpush1.bf16.msra.mxu0 %v3413
    %3444 = vmatprep.subr.bf16.mxu0 0
    %3445 = vmatpush1.bf16.msra.mxu0 %v3412
    %3446 = vmatprep.subr.bf16.mxu0 0
    %3447 = vmatpush1.bf16.msra.mxu0 %v3411
    %3448 = vmatprep.subr.bf16.mxu0 0
    %3449 = vmatpush2.bf16.msra.mxu0 0
    %3450 = vmatprep.subr.bf16.mxu0 0
    %3451 = vmatpush2.bf16.msra.mxu0 0
    %3452 = vmatprep.subr.bf16.mxu0 0
    %3453 = vmatpush2.bf16.msra.mxu0 0
    %3454 = vmatprep.subr.bf16.mxu0 0
    %3455 = vmatpush2.bf16.msra.mxu0 0
    %3456 = vmatprep.subr.bf16.mxu0 0
    %3457 = vmatpush2.bf16.msra.mxu0 0
    %3458 = vmatprep.subr.bf16.mxu0 0
    %3459 = vmatpush2.bf16.msra.mxu0 0
    %3460 = vmatprep.subr.bf16.mxu0 0
    %3461 = vmatpush2.bf16.msra.mxu0 0
    %3462 = vmatprep.subr.bf16.mxu0 0
    %3463 = vmatpush2.bf16.msra.mxu0 0
    %3464 = vmatprep.mubr.bf16.mxu0 0
    %3465 = vmatmul.mubr.bf16.gmra.mxu0 %v3426
    %v3466 = vpop.f32.mrf.mxu0
    %v3467 = vadd.f32 %v3383, %v3466
    %v3468 = vpop.f32.mrf.mxu0
    %v3469 = vpop.f32.mrf.mxu0
    %v3470 = vpop.f32.mrf.mxu0
    %3471 = vdwg.mxu0
    %v3472 = vtanh.pop %v3467
    %3473 = vst [vmem:[#allocation2] sm:$0xff] %v3472
    // Predicated region
    $region30: #{gcn_forward.1} parent=1 // pred_check
      _
    $region31: #{gcn_forward.1} parent=1 // pred_check_branch
      %3475 = sbr.rel (0) target = $region33
    $region32: #{gcn_forward.1} parent=1 // pred_region
      %s3477 = ssub.s32 128, 128
      %3478 = vsyncadd [#allocation3], %s3477
      %s3480 = sshll.u32 [#allocation2], 4
      %s3481 = int_to_ptr.vmem [resolvable:$true] %s3480
      %3483 = dma.vmem_to_hbm [thread:$0]  %s3481, 128, %s7, [#allocation3]
    $region33: #{gcn_forward.1} parent=1 // pred_fallthru
      _
    // Predicated region
    $region34: #{gcn_forward.1} parent=1 // pred_check
      _
    $region35: #{gcn_forward.1} parent=1 // pred_check_branch
      %3485 = sbr.rel (0) target = $region37
    $region36: #{gcn_forward.1} parent=1 // pred_region
      %3486 = dma.done [#allocation3], 128
    $region37: #{gcn_forward.1} parent=1 // pred_fallthru
      _
    %3487 = vsyncpa [#allocation3], 1

</llo_original>
